<compile_context>
chip_gen: v7x
topology: tpu7x:2x2x1
jax: 0.10.0
libtpu: 0.0.40
codegen_flags: <defaults>
</compile_context>

<pallas_src>
import jax
import jax.numpy as jnp
from jax.experimental import pallas as pl
from jax.experimental.pallas import tpu as pltpu

S_DIM = 16
OUT_PAD = 128        # lane-dense padded output width (first S_DIM columns are real)
LN_EPS = 1e-5        # torch.nn.LayerNorm default eps
SM_EPS = 1e-15       # masked_softmax epsilon


def _layer_norm(x, eps=LN_EPS):
    # LayerNorm over last dim, elementwise_affine=False (no gamma/beta)
    mean = jnp.mean(x, axis=-1, keepdims=True)
    var = jnp.mean((x - mean) ** 2, axis=-1, keepdims=True)
    return (x - mean) * jax.lax.rsqrt(var + eps)


def attention_similarity_kernel(a_ref, am_ref, b_ref, bm_ref, p_ref,
                                wt_ref, bias_ref, o_ref):
    H = a_ref.shape[-1]
    rescale = 1.0 / (H ** 0.5)

    a = a_ref[...].astype(jnp.float32)        # (Bt, La, H)
    b = b_ref[...].astype(jnp.float32)        # (Bt, Lb, H)
    a_mask = am_ref[...].astype(jnp.float32)  # (Bt, La)
    b_mask = bm_ref[...].astype(jnp.float32)  # (Bt, Lb)
    p = p_ref[...].astype(jnp.float32)        # (Bt, H)

    # LayerNorm (no affine)
    a_ln = _layer_norm(a)
    b_ln = _layer_norm(b)

    # attention logits: ln(x) . p, scaled by 1/sqrt(H)  (repr_dropout == identity in eval)
    # TODO(synk): for realistic H (>=256) route these contractions through the MXU
    # (batched dot_general) to relieve the VALU/XLU slots; at H=32 the VPU form is fine.
    a_s = jnp.sum(a_ln * p[:, None, :], axis=-1) * rescale   # (Bt, La)
    b_s = jnp.sum(b_ln * p[:, None, :], axis=-1) * rescale   # (Bt, Lb)

    # masked softmax over the sequence axis (faithful to torch masked_softmax:
    # no max-subtraction, epsilon added to the denominator).  The reciprocal is
    # routed to the otherwise-idle EUP slot.
    a_exp = jnp.exp(a_s) * a_mask
    a_attn = a_exp * pl.reciprocal(
        jnp.sum(a_exp, axis=1, keepdims=True) + SM_EPS, approx=True)
    b_exp = jnp.exp(b_s) * b_mask
    b_attn = b_exp * pl.reciprocal(
        jnp.sum(b_exp, axis=1, keepdims=True) + SM_EPS, approx=True)

    # attention-weighted sums -> (Bt, H)
    a_vec = jnp.sum(a_ln * a_attn[:, :, None], axis=1)
    b_vec = jnp.sum(b_ln * b_attn[:, :, None], axis=1)

    # ffnn on concat([p, a, b, p*a, p*b]) as a SINGLE fused MXU matmul:
    # (Bt, 5H) @ (5H, OUT_PAD) — K=5H fits one MXU pass on v6e/v7x.
    x = jnp.concatenate([p, a_vec, b_vec, p * a_vec, p * b_vec], axis=-1)
    y = jnp.dot(x, wt_ref[...], preferred_element_type=jnp.float32) + bias_ref[...]
    o_ref[...] = y.astype(o_ref.dtype)        # lane-dense (Bt, 128) store


def prepare_ffnn_params(w, bias):
    """One-time parameter prep (do this at module-init time, NOT per forward):
    transpose nn.Linear weight (S_DIM, 5H) -> (5H, S_DIM) and zero-pad the
    output axis to OUT_PAD lanes so the kernel's final matmul/store is lane-dense."""
    w = jnp.asarray(w, jnp.float32)                      # (S_DIM, 5H)
    bias = jnp.asarray(bias, jnp.float32)                # (S_DIM,)
    five_h = w.shape[1]
    wt_pad = jnp.zeros((five_h, OUT_PAD), jnp.float32).at[:, :S_DIM].set(w.T)
    bias_pad = jnp.zeros((1, OUT_PAD), jnp.float32).at[0, :S_DIM].set(bias)
    return wt_pad, bias_pad


def attention_similarity(a, a_mask, b, b_mask, p, wt_pad, bias_pad, *, block_b=8):
    """a:(B,La,H) a_mask:(B,La) b:(B,Lb,H) b_mask:(B,Lb) p:(B,H)
       wt_pad:(5H,OUT_PAD) bias_pad:(1,OUT_PAD)  ->  (B, S_DIM)"""
    B, La, H = a.shape
    Lb = b.shape[1]
    bt = B if B < block_b else block_b   # batch tile
    # Per-step VMEM ~= 2 (double-buffer) * bt*(La+Lb)*H*4B plus weights/masks.
    # At production sizes re-derive block_b per generation: keep well under the
    # scoped VMEM limit (16 MiB default on v5e, 32 MiB on v6e/v7x; 64 MiB physical
    # on v7x) or raise vmem_limit_bytes via pltpu.CompilerParams.
    grid = (pl.cdiv(B, bt),)

    out_pad = pl.pallas_call(
        attention_similarity_kernel,
        out_shape=jax.ShapeDtypeStruct((B, OUT_PAD), jnp.float32),
        grid=grid,
        in_specs=[
            pl.BlockSpec((bt, La, H), lambda i: (i, 0, 0)),
            pl.BlockSpec((bt, La),    lambda i: (i, 0)),
            pl.BlockSpec((bt, Lb, H), lambda i: (i, 0, 0)),
            pl.BlockSpec((bt, Lb),    lambda i: (i, 0)),
            pl.BlockSpec((bt, H),     lambda i: (i, 0)),
            pl.BlockSpec((5 * H, OUT_PAD), lambda i: (0, 0)),
            pl.BlockSpec((1, OUT_PAD),     lambda i: (0, 0)),
        ],
        out_specs=pl.BlockSpec((bt, OUT_PAD), lambda i: (i, 0)),
        compiler_params=pltpu.CompilerParams(
            dimension_semantics=("parallel",)),   # shards batch tiles across v7x's 2 TCs
    )(a, a_mask, b, b_mask, p, wt_pad, bias_pad)
    return out_pad[:, :S_DIM]


def _reference(a, a_mask, b, b_mask, p, w, bias):
    H = a.shape[-1]
    rescale = 1.0 / jnp.sqrt(H)
    a_ln = _layer_norm(a)
    b_ln = _layer_norm(b)
    a_s = jnp.einsum("blh,bh->bl", a_ln, p) * rescale
    b_s = jnp.einsum("blh,bh->bl", b_ln, p) * rescale
    a_exp = jnp.exp(a_s) * a_mask
    a_attn = a_exp / (a_exp.sum(1, keepdims=True) + SM_EPS)
    b_exp = jnp.exp(b_s) * b_mask
    b_attn = b_exp / (b_exp.sum(1, keepdims=True) + SM_EPS)
    a_v = (a_ln * a_attn[:, :, None]).sum(1)
    b_v = (b_ln * b_attn[:, :, None]).sum(1)
    x = jnp.concatenate([p, a_v, b_v, p * a_v, p * b_v], axis=1)
    return x @ w.T + bias


if __name__ == "__main__":
    B, La, Lb, H = 16, 8, 8, 32
    key = jax.random.PRNGKey(0)
    k_a, k_b, k_p, k_w, k_bias = jax.random.split(key, 5)

    a = jax.random.normal(k_a, (B, La, H), jnp.float32)
    b = jax.random.normal(k_b, (B, Lb, H), jnp.float32)
    p = jax.random.normal(k_p, (B, H), jnp.float32)

    # masks: variable number of valid leading positions per batch row (float 0/1)
    lens_a = (jnp.arange(B) % La) + 1
    lens_b = ((jnp.arange(B) + 3) % Lb) + 1
    a_mask = (jnp.arange(La)[None, :] < lens_a[:, None]).astype(jnp.float32)
    b_mask = (jnp.arange(Lb)[None, :] < lens_b[:, None]).astype(jnp.float32)

    # ffnn params: kaiming_normal_ weight (fan_in = 5H, gain = sqrt(2)), default-uniform bias
    fan_in = 5 * H
    w = jax.random.normal(k_w, (S_DIM, fan_in), jnp.float32) * jnp.sqrt(2.0 / fan_in)
    bound = 1.0 / jnp.sqrt(fan_in)
    bias = jax.random.uniform(k_bias, (S_DIM,), jnp.float32, -bound, bound)

    # one-time weight prep (transpose + lane-pad), outside the per-call path
    wt_pad, bias_pad = prepare_ffnn_params(w, bias)

    y = attention_similarity(a, a_mask, b, b_mask, p, wt_pad, bias_pad, block_b=8)
    jax.block_until_ready(y)

    y_ref = _reference(a, a_mask, b, b_mask, p, w, bias)
    # tolerance allows for the EUP approximate reciprocal in the softmax normalization
    assert jnp.allclose(y, y_ref, atol=5e-3, rtol=5e-3), "mismatch vs reference"

    print("KERNEL_OK")
</pallas_src>

<mosaic_0001>
module attributes {stable_mosaic.version = 11 : i64} {
  func.func @attention_similarity_kernel(%arg0: i32, %arg1: memref<8x8x32xf32, #tpu.memory_space<vmem>>, %arg2: memref<8x8xf32, #tpu.memory_space<vmem>>, %arg3: memref<8x8x32xf32, #tpu.memory_space<vmem>>, %arg4: memref<8x8xf32, #tpu.memory_space<vmem>>, %arg5: memref<8x32xf32, #tpu.memory_space<vmem>>, %arg6: memref<160x128xf32, #tpu.memory_space<vmem>>, %arg7: memref<1x128xf32, #tpu.memory_space<vmem>>, %arg8: memref<8x128xf32, #tpu.memory_space<vmem>>) attributes {dimension_semantics = [#tpu.dimension_semantics<parallel>], iteration_bounds = array<i64: 2>, scalar_prefetch = 0 : i64, scratch_operands = 0 : i64, tpu.core_type = #tpu.core_type<tc>, window_params = [{transform_indices = @transform_0, window_bounds = array<i64: 8, 8, 32>}, {transform_indices = @transform_1, window_bounds = array<i64: 8, 8>}, {transform_indices = @transform_2, window_bounds = array<i64: 8, 8, 32>}, {transform_indices = @transform_3, window_bounds = array<i64: 8, 8>}, {transform_indices = @transform_4, window_bounds = array<i64: 8, 32>}, {pipeline_mode = #tpu.pipeline_mode<synchronous>, transform_indices = @transform_5, window_bounds = array<i64: 160, 128>}, {pipeline_mode = #tpu.pipeline_mode<synchronous>, transform_indices = @transform_6, window_bounds = array<i64: 1, 128>}, {transform_indices = @transform_7, window_bounds = array<i64: 8, 128>}]} {
    %c0 = arith.constant 0 : index
    %c0_0 = arith.constant 0 : index
    %c0_1 = arith.constant 0 : index
    %0 = vector.load %arg1[%c0, %c0_0, %c0_1] : memref<8x8x32xf32, #tpu.memory_space<vmem>>, vector<8x8x32xf32>
    %c0_2 = arith.constant 0 : index
    %c0_3 = arith.constant 0 : index
    %c0_4 = arith.constant 0 : index
    %1 = vector.load %arg3[%c0_2, %c0_3, %c0_4] : memref<8x8x32xf32, #tpu.memory_space<vmem>>, vector<8x8x32xf32>
    %c0_5 = arith.constant 0 : index
    %c0_6 = arith.constant 0 : index
    %2 = vector.load %arg2[%c0_5, %c0_6] : memref<8x8xf32, #tpu.memory_space<vmem>>, vector<8x8xf32>
    %c0_7 = arith.constant 0 : index
    %c0_8 = arith.constant 0 : index
    %3 = vector.load %arg4[%c0_7, %c0_8] : memref<8x8xf32, #tpu.memory_space<vmem>>, vector<8x8xf32>
    %c0_9 = arith.constant 0 : index
    %c0_10 = arith.constant 0 : index
    %4 = vector.load %arg5[%c0_9, %c0_10] : memref<8x32xf32, #tpu.memory_space<vmem>>, vector<8x32xf32>
    %cst = arith.constant dense<0.000000e+00> : vector<8x8xf32>
    %5 = vector.multi_reduction <add>, %0, %cst [2] : vector<8x8x32xf32> to vector<8x8xf32>
    %6 = vector.shape_cast %5 : vector<8x8xf32> to vector<8x8x1xf32>
    %cst_11 = arith.constant 3.200000e+01 : f32
    %7 = vector.broadcast %cst_11 : f32 to vector<8x8x1xf32>
    %8 = arith.divf %6, %7 : vector<8x8x1xf32>
    %9 = vector.broadcast %8 : vector<8x8x1xf32> to vector<8x8x32xf32>
    %10 = arith.subf %0, %9 : vector<8x8x32xf32>
    %11 = arith.mulf %10, %10 : vector<8x8x32xf32>
    %cst_12 = arith.constant dense<0.000000e+00> : vector<8x8xf32>
    %12 = vector.multi_reduction <add>, %11, %cst_12 [2] : vector<8x8x32xf32> to vector<8x8xf32>
    %13 = vector.shape_cast %12 : vector<8x8xf32> to vector<8x8x1xf32>
    %cst_13 = arith.constant 3.200000e+01 : f32
    %14 = vector.broadcast %cst_13 : f32 to vector<8x8x1xf32>
    %15 = arith.divf %13, %14 : vector<8x8x1xf32>
    %16 = vector.broadcast %8 : vector<8x8x1xf32> to vector<8x8x32xf32>
    %17 = arith.subf %0, %16 : vector<8x8x32xf32>
    %cst_14 = arith.constant 9.99999974E-6 : f32
    %18 = vector.broadcast %cst_14 : f32 to vector<8x8x1xf32>
    %19 = arith.addf %15, %18 : vector<8x8x1xf32>
    %20 = math.rsqrt %19 : vector<8x8x1xf32>
    %21 = vector.broadcast %20 : vector<8x8x1xf32> to vector<8x8x32xf32>
    %22 = arith.mulf %17, %21 : vector<8x8x32xf32>
    %cst_15 = arith.constant dense<0.000000e+00> : vector<8x8xf32>
    %23 = vector.multi_reduction <add>, %1, %cst_15 [2] : vector<8x8x32xf32> to vector<8x8xf32>
    %24 = vector.shape_cast %23 : vector<8x8xf32> to vector<8x8x1xf32>
    %cst_16 = arith.constant 3.200000e+01 : f32
    %25 = vector.broadcast %cst_16 : f32 to vector<8x8x1xf32>
    %26 = arith.divf %24, %25 : vector<8x8x1xf32>
    %27 = vector.broadcast %26 : vector<8x8x1xf32> to vector<8x8x32xf32>
    %28 = arith.subf %1, %27 : vector<8x8x32xf32>
    %29 = arith.mulf %28, %28 : vector<8x8x32xf32>
    %cst_17 = arith.constant dense<0.000000e+00> : vector<8x8xf32>
    %30 = vector.multi_reduction <add>, %29, %cst_17 [2] : vector<8x8x32xf32> to vector<8x8xf32>
    %31 = vector.shape_cast %30 : vector<8x8xf32> to vector<8x8x1xf32>
    %cst_18 = arith.constant 3.200000e+01 : f32
    %32 = vector.broadcast %cst_18 : f32 to vector<8x8x1xf32>
    %33 = arith.divf %31, %32 : vector<8x8x1xf32>
    %34 = vector.broadcast %26 : vector<8x8x1xf32> to vector<8x8x32xf32>
    %35 = arith.subf %1, %34 : vector<8x8x32xf32>
    %cst_19 = arith.constant 9.99999974E-6 : f32
    %36 = vector.broadcast %cst_19 : f32 to vector<8x8x1xf32>
    %37 = arith.addf %33, %36 : vector<8x8x1xf32>
    %38 = math.rsqrt %37 : vector<8x8x1xf32>
    %39 = vector.broadcast %38 : vector<8x8x1xf32> to vector<8x8x32xf32>
    %40 = arith.mulf %35, %39 : vector<8x8x32xf32>
    %41 = vector.shape_cast %4 : vector<8x32xf32> to vector<8x1x32xf32>
    %42 = vector.broadcast %41 : vector<8x1x32xf32> to vector<8x8x32xf32>
    %43 = arith.mulf %22, %42 : vector<8x8x32xf32>
    %cst_20 = arith.constant dense<0.000000e+00> : vector<8x8xf32>
    %44 = vector.multi_reduction <add>, %43, %cst_20 [2] : vector<8x8x32xf32> to vector<8x8xf32>
    %cst_21 = arith.constant 0.176776692 : f32
    %45 = vector.broadcast %cst_21 : f32 to vector<8x8xf32>
    %46 = arith.mulf %44, %45 : vector<8x8xf32>
    %47 = vector.shape_cast %4 : vector<8x32xf32> to vector<8x1x32xf32>
    %48 = vector.broadcast %47 : vector<8x1x32xf32> to vector<8x8x32xf32>
    %49 = arith.mulf %40, %48 : vector<8x8x32xf32>
    %cst_22 = arith.constant dense<0.000000e+00> : vector<8x8xf32>
    %50 = vector.multi_reduction <add>, %49, %cst_22 [2] : vector<8x8x32xf32> to vector<8x8xf32>
    %cst_23 = arith.constant 0.176776692 : f32
    %51 = vector.broadcast %cst_23 : f32 to vector<8x8xf32>
    %52 = arith.mulf %50, %51 : vector<8x8xf32>
    %53 = math.exp %46 : vector<8x8xf32>
    %54 = arith.mulf %53, %2 : vector<8x8xf32>
    %cst_24 = arith.constant dense<0.000000e+00> : vector<8xf32>
    %55 = vector.multi_reduction <add>, %54, %cst_24 [1] : vector<8x8xf32> to vector<8xf32>
    %56 = vector.shape_cast %55 : vector<8xf32> to vector<8x1xf32>
    %cst_25 = arith.constant 1.000000e-15 : f32
    %57 = vector.broadcast %cst_25 : f32 to vector<8x1xf32>
    %58 = arith.addf %56, %57 : vector<8x1xf32>
    %59 = tpu.reciprocal %58 {approx = true} : vector<8x1xf32> -> vector<8x1xf32>
    %60 = vector.broadcast %59 : vector<8x1xf32> to vector<8x8xf32>
    %61 = arith.mulf %54, %60 : vector<8x8xf32>
    %62 = math.exp %52 : vector<8x8xf32>
    %63 = arith.mulf %62, %3 : vector<8x8xf32>
    %cst_26 = arith.constant dense<0.000000e+00> : vector<8xf32>
    %64 = vector.multi_reduction <add>, %63, %cst_26 [1] : vector<8x8xf32> to vector<8xf32>
    %65 = vector.shape_cast %64 : vector<8xf32> to vector<8x1xf32>
    %cst_27 = arith.constant 1.000000e-15 : f32
    %66 = vector.broadcast %cst_27 : f32 to vector<8x1xf32>
    %67 = arith.addf %65, %66 : vector<8x1xf32>
    %68 = tpu.reciprocal %67 {approx = true} : vector<8x1xf32> -> vector<8x1xf32>
    %69 = vector.broadcast %68 : vector<8x1xf32> to vector<8x8xf32>
    %70 = arith.mulf %63, %69 : vector<8x8xf32>
    %71 = vector.shape_cast %61 : vector<8x8xf32> to vector<8x8x1xf32>
    %72 = vector.broadcast %71 : vector<8x8x1xf32> to vector<8x8x32xf32>
    %73 = arith.mulf %22, %72 : vector<8x8x32xf32>
    %cst_28 = arith.constant dense<0.000000e+00> : vector<8x32xf32>
    %74 = vector.multi_reduction <add>, %73, %cst_28 [1] : vector<8x8x32xf32> to vector<8x32xf32>
    %75 = vector.shape_cast %70 : vector<8x8xf32> to vector<8x8x1xf32>
    %76 = vector.broadcast %75 : vector<8x8x1xf32> to vector<8x8x32xf32>
    %77 = arith.mulf %40, %76 : vector<8x8x32xf32>
    %cst_29 = arith.constant dense<0.000000e+00> : vector<8x32xf32>
    %78 = vector.multi_reduction <add>, %77, %cst_29 [1] : vector<8x8x32xf32> to vector<8x32xf32>
    %79 = arith.mulf %4, %74 : vector<8x32xf32>
    %80 = arith.mulf %4, %78 : vector<8x32xf32>
    %81 = tpu.concatenate %4, %74, %78, %79, %80 in 1 : vector<8x32xf32>, vector<8x32xf32>, vector<8x32xf32>, vector<8x32xf32>, vector<8x32xf32> -> vector<8x160xf32>
    %c0_30 = arith.constant 0 : index
    %c0_31 = arith.constant 0 : index
    %82 = vector.load %arg6[%c0_30, %c0_31] : memref<160x128xf32, #tpu.memory_space<vmem>>, vector<160x128xf32>
    %cst_32 = arith.constant dense<0.000000e+00> : vector<8x128xf32>
    %83 = tpu.matmul %81, %82, %cst_32 {dimension_numbers = #tpu.dot_dimension_numbers<[1], [0], [0], [1], [0, 0, 1, 1], [], []>} : vector<8x160xf32>, vector<160x128xf32>, vector<8x128xf32> -> vector<8x128xf32>
    %c0_33 = arith.constant 0 : index
    %c0_34 = arith.constant 0 : index
    %84 = vector.load %arg7[%c0_33, %c0_34] : memref<1x128xf32, #tpu.memory_space<vmem>>, vector<1x128xf32>
    %85 = vector.broadcast %84 : vector<1x128xf32> to vector<8x128xf32>
    %86 = arith.addf %83, %85 : vector<8x128xf32>
    %c0_35 = arith.constant 0 : index
    %c0_36 = arith.constant 0 : index
    %87 = vector.load %arg8[%c0_35, %c0_36] : memref<8x128xf32, #tpu.memory_space<vmem>>, vector<8x128xf32>
    tpu.vector_store %arg8[%c0_35, %c0_36], %86 {strides = array<i32>} : memref<8x128xf32, #tpu.memory_space<vmem>>, vector<8x128xf32>,
    return
  }
  func.func @transform_0(%arg0: i32) -> (i32, i32, i32) {
    %c0_i32 = arith.constant 0 : i32
    %c0_i32_0 = arith.constant 0 : i32
    %c0_i32_1 = arith.constant 0 : i32
    return %arg0, %c0_i32, %c0_i32_0 : i32, i32, i32
  }
  func.func @transform_1(%arg0: i32) -> (i32, i32) {
    %c0_i32 = arith.constant 0 : i32
    %c0_i32_0 = arith.constant 0 : i32
    return %arg0, %c0_i32 : i32, i32
  }
  func.func @transform_2(%arg0: i32) -> (i32, i32, i32) {
    %c0_i32 = arith.constant 0 : i32
    %c0_i32_0 = arith.constant 0 : i32
    %c0_i32_1 = arith.constant 0 : i32
    return %arg0, %c0_i32, %c0_i32_0 : i32, i32, i32
  }
  func.func @transform_3(%arg0: i32) -> (i32, i32) {
    %c0_i32 = arith.constant 0 : i32
    %c0_i32_0 = arith.constant 0 : i32
    return %arg0, %c0_i32 : i32, i32
  }
  func.func @transform_4(%arg0: i32) -> (i32, i32) {
    %c0_i32 = arith.constant 0 : i32
    %c0_i32_0 = arith.constant 0 : i32
    return %arg0, %c0_i32 : i32, i32
  }
  func.func @transform_5(%arg0: i32) -> (i32, i32) {
    %c0_i32 = arith.constant 0 : i32
    %c0_i32_0 = arith.constant 0 : i32
    %c0_i32_1 = arith.constant 0 : i32
    return %c0_i32, %c0_i32_0 : i32, i32
  }
  func.func @transform_6(%arg0: i32) -> (i32, i32) {
    %c0_i32 = arith.constant 0 : i32
    %c0_i32_0 = arith.constant 0 : i32
    %c0_i32_1 = arith.constant 0 : i32
    return %c0_i32, %c0_i32_0 : i32, i32
  }
  func.func @transform_7(%arg0: i32) -> (i32, i32) {
    %c0_i32 = arith.constant 0 : i32
    %c0_i32_0 = arith.constant 0 : i32
    return %arg0, %c0_i32 : i32, i32
  }
}

</mosaic_0001>

<llo_original>
// kernel: tpu_custom_call.1
$region0: #{tpu_custom_call.1}
  #allocation0 [shape = 'u32[]', space=smem, size = 0x4, offset = 0x4, fixed_abs, tag = 'smem constant byte address 0x4 - core index']
  #allocation1 [shape = 'u32[144,128]{1,0:T(1,128)}', space=vmem, size = 0x12000, scoped, tag = 'internal scratch']
  %s0 = inlined_call_operand.hbm [shape: f32[16,8,32], index: 0, kind: input, shape index: {}]
  %s1 = inlined_call_operand.vmem [shape: f32[16,8], index: 1, kind: input, shape index: {}]
  %s2 = inlined_call_operand.hbm [shape: f32[16,8,32], index: 2, kind: input, shape index: {}]
  %s3 = inlined_call_operand.vmem [shape: f32[16,8], index: 3, kind: input, shape index: {}]
  %s4 = inlined_call_operand.vmem [shape: f32[16,32], index: 4, kind: input, shape index: {}]
  %s5 = inlined_call_operand.hbm [shape: f32[160,128], index: 5, kind: input, shape index: {}]
  %s6 = inlined_call_operand.vmem [shape: f32[1,128], index: 6, kind: input, shape index: {}]
  %s7 = inlined_call_operand.hbm [shape: f32[16,128], index: 7, kind: output, shape index: {}]
  %s8 = sld [smem:[#allocation0]]
  $region73: #{tpu_custom_call.1} parent=0
    _
  %s10 = ssub.s32 1, %s8
  %s11 = scalar_select 0, %s10, %s8
  $region1: #{tpu_custom_call.1} parent=0
    #allocation2 [shape = 'u8[65536]{0}', space=vmem, size = 0x10000, scoped, tag = 'input window, operand 0']
    #allocation3 [shape = 's32[2]{0}', space=sflag, size = 0x8, scoped, tag = 'scoped memory for tpu_custom_call.1']
    #allocation4 [shape = 's32[2]{0}', space=sflag, size = 0x8, scoped, tag = 'scoped memory for tpu_custom_call.1']
    #allocation5 [shape = 'u8[65536]{0}', space=vmem, size = 0x10000, scoped, tag = 'input window, operand 2']
    #allocation6 [shape = 's32[2]{0}', space=sflag, size = 0x8, scoped, tag = 'scoped memory for tpu_custom_call.1']
    #allocation7 [shape = 'u8[81920]{0}', space=vmem, size = 0x14000, scoped, tag = 'input window, operand 5, single buffered']
    #allocation8 [shape = 'u8[8192]{0}', space=vmem, size = 0x2000, scoped, tag = 'output window, operand 0']
    %12 = vsyncpa [#allocation3], 0
    %s13 = scalar_lea.sflag [#allocation3], 1
    %14 = vsyncpa %s13, 0
    %15 = vsyncpa [#allocation6], 0
    %s16 = scalar_lea.sflag [#allocation6], 1
    %17 = vsyncpa %s16, 0
    %18 = vsyncpa [#allocation4], 0
    %s19 = scalar_lea.sflag [#allocation4], 1
    %20 = vsyncpa %s19, 0
    loop: start=0, step=1, limit=4
    $region2: #{tpu_custom_call.1} parent=1 // loop_pre_header
      _
    $region3: #{tpu_custom_call.1} parent=1 // loop_header
      %s22 = sphi 0, %s26
      %p23 = scmp.ge.s32.totalorder %s22, 4
      %s32 = sphi 0, %s34
      %s35 = sphi 0, %s32
      %s36 = sphi 0, %s35
      %s52 = sphi 0, %s36
      %s58 = sphi 0, %s60
      %s61 = sphi 0, %s58
      %s62 = sphi 0, %s61
      %s78 = sphi 0, %s62
      %s84 = sphi 0, %s86
      %s87 = sphi 0, %s84
      %s88 = sphi 0, %s87
      %s104 = sphi 0, %s88
      %s110 = sphi 0, %s112
      %s113 = sphi 0, %s110
      %s114 = sphi 0, %s113
      %s130 = sphi 0, %s114
      %s136 = sphi 0, %s138
      %s139 = sphi 0, %s136
      %s140 = sphi 0, %s139
      %s156 = sphi 0, %s140
      %s160 = sphi 0, %s160
      %s162 = sphi 0, %s160
      %s163 = sphi 0, %s162
      %s177 = sphi 0, %s163
      %s181 = sphi 0, %s181
      %s183 = sphi 0, %s181
      %s184 = sphi 0, %s183
      %s198 = sphi 0, %s184
      %s204 = sphi 0, %s206
      %s207 = sphi 0, %s204
      %s208 = sphi 0, %s207
      %s224 = sphi 0, %s208
    $region4: #{tpu_custom_call.1} parent=1 // loop_header_branch
      %25 = sbr.rel (%p23) target = $region8
    $region5: #{tpu_custom_call.1} parent=1 // loop_body
      %s27 = ssub.s32 %s22, 1
      %s28 = ssub.s32 %s22, 2
      %s29 = sadd.s32 %s22, 1
      %s30 = ssub.s32 %s22, %s29
      %p31 = scmp.eq.s32.totalorder %s30, 0
      %s33 = sadd.s32 %s32, 1
      %s34 = scalar_select %p31, %s32, %s33
      %p37 = pneg %p31
      %p38 = scmp.eq.s32.totalorder %s22, 1
      %p39 = por %p37, %p38
      %p40 = scmp.ne.s32.totalorder %s32, %s35
      %p41 = scmp.eq.s32.totalorder %s22, 0
      %p42 = por %p40, %p41
      %p43 = scmp.ne.s32.totalorder %s32, %s35
      %p44 = scmp.eq.s32.totalorder %s27, 1
      %p45 = por %p43, %p44
      %p46 = scmp.ne.s32.totalorder %s35, %s36
      %p47 = scmp.eq.s32.totalorder %s27, 0
      %p48 = por %p46, %p47
      %p49 = scmp.ne.s32.totalorder %s35, %s36
      %p50 = scmp.eq.s32.totalorder %s28, 1
      %p51 = por %p49, %p50
      %p53 = scmp.ne.s32.totalorder %s36, %s52
      %p54 = scmp.eq.s32.totalorder %s28, 0
      %p55 = por %p53, %p54
      %s56 = ssub.s32 %s22, %s29
      %p57 = scmp.eq.s32.totalorder %s56, 0
      %s59 = sadd.s32 %s58, 1
      %s60 = scalar_select %p57, %s58, %s59
      %p63 = pneg %p57
      %p64 = scmp.eq.s32.totalorder %s22, 1
      %p65 = por %p63, %p64
      %p66 = scmp.ne.s32.totalorder %s58, %s61
      %p67 = scmp.eq.s32.totalorder %s22, 0
      %p68 = por %p66, %p67
      %p69 = scmp.ne.s32.totalorder %s58, %s61
      %p70 = scmp.eq.s32.totalorder %s27, 1
      %p71 = por %p69, %p70
      %p72 = scmp.ne.s32.totalorder %s61, %s62
      %p73 = scmp.eq.s32.totalorder %s27, 0
      %p74 = por %p72, %p73
      %p75 = scmp.ne.s32.totalorder %s61, %s62
      %p76 = scmp.eq.s32.totalorder %s28, 1
      %p77 = por %p75, %p76
      %p79 = scmp.ne.s32.totalorder %s62, %s78
      %p80 = scmp.eq.s32.totalorder %s28, 0
      %p81 = por %p79, %p80
      %s82 = ssub.s32 %s22, %s29
      %p83 = scmp.eq.s32.totalorder %s82, 0
      %s85 = sadd.s32 %s84, 1
      %s86 = scalar_select %p83, %s84, %s85
      %p89 = pneg %p83
      %p90 = scmp.eq.s32.totalorder %s22, 1
      %p91 = por %p89, %p90
      %p92 = scmp.ne.s32.totalorder %s84, %s87
      %p93 = scmp.eq.s32.totalorder %s22, 0
      %p94 = por %p92, %p93
      %p95 = scmp.ne.s32.totalorder %s84, %s87
      %p96 = scmp.eq.s32.totalorder %s27, 1
      %p97 = por %p95, %p96
      %p98 = scmp.ne.s32.totalorder %s87, %s88
      %p99 = scmp.eq.s32.totalorder %s27, 0
      %p100 = por %p98, %p99
      %p101 = scmp.ne.s32.totalorder %s87, %s88
      %p102 = scmp.eq.s32.totalorder %s28, 1
      %p103 = por %p101, %p102
      %p105 = scmp.ne.s32.totalorder %s88, %s104
      %p106 = scmp.eq.s32.totalorder %s28, 0
      %p107 = por %p105, %p106
      %s108 = ssub.s32 %s22, %s29
      %p109 = scmp.eq.s32.totalorder %s108, 0
      %s111 = sadd.s32 %s110, 1
      %s112 = scalar_select %p109, %s110, %s111
      %p115 = pneg %p109
      %p116 = scmp.eq.s32.totalorder %s22, 1
      %p117 = por %p115, %p116
      %p118 = scmp.ne.s32.totalorder %s110, %s113
      %p119 = scmp.eq.s32.totalorder %s22, 0
      %p120 = por %p118, %p119
      %p121 = scmp.ne.s32.totalorder %s110, %s113
      %p122 = scmp.eq.s32.totalorder %s27, 1
      %p123 = por %p121, %p122
      %p124 = scmp.ne.s32.totalorder %s113, %s114
      %p125 = scmp.eq.s32.totalorder %s27, 0
      %p126 = por %p124, %p125
      %p127 = scmp.ne.s32.totalorder %s113, %s114
      %p128 = scmp.eq.s32.totalorder %s28, 1
      %p129 = por %p127, %p128
      %p131 = scmp.ne.s32.totalorder %s114, %s130
      %p132 = scmp.eq.s32.totalorder %s28, 0
      %p133 = por %p131, %p132
      %s134 = ssub.s32 %s22, %s29
      %p135 = scmp.eq.s32.totalorder %s134, 0
      %s137 = sadd.s32 %s136, 1
      %s138 = scalar_select %p135, %s136, %s137
      %p141 = pneg %p135
      %p142 = scmp.eq.s32.totalorder %s22, 1
      %p143 = por %p141, %p142
      %p144 = scmp.ne.s32.totalorder %s136, %s139
      %p145 = scmp.eq.s32.totalorder %s22, 0
      %p146 = por %p144, %p145
      %p147 = scmp.ne.s32.totalorder %s136, %s139
      %p148 = scmp.eq.s32.totalorder %s27, 1
      %p149 = por %p147, %p148
      %p150 = scmp.ne.s32.totalorder %s139, %s140
      %p151 = scmp.eq.s32.totalorder %s27, 0
      %p152 = por %p150, %p151
      %p153 = scmp.ne.s32.totalorder %s139, %s140
      %p154 = scmp.eq.s32.totalorder %s28, 1
      %p155 = por %p153, %p154
      %p157 = scmp.ne.s32.totalorder %s140, %s156
      %p158 = scmp.eq.s32.totalorder %s28, 0
      %p159 = por %p157, %p158
      %s161 = sadd.s32 %s160, 1
      %p164 = scmp.eq.s32.totalorder %s22, 1
      %p165 = scmp.ne.s32.totalorder %s160, %s162
      %p166 = scmp.eq.s32.totalorder %s22, 0
      %p167 = por %p165, %p166
      %p168 = scmp.ne.s32.totalorder %s160, %s162
      %p169 = scmp.eq.s32.totalorder %s27, 1
      %p170 = por %p168, %p169
      %p171 = scmp.ne.s32.totalorder %s162, %s163
      %p172 = scmp.eq.s32.totalorder %s27, 0
      %p173 = por %p171, %p172
      %p174 = scmp.ne.s32.totalorder %s162, %s163
      %p175 = scmp.eq.s32.totalorder %s28, 1
      %p176 = por %p174, %p175
      %p178 = scmp.ne.s32.totalorder %s163, %s177
      %p179 = scmp.eq.s32.totalorder %s28, 0
      %p180 = por %p178, %p179
      %s182 = sadd.s32 %s181, 1
      %p185 = scmp.eq.s32.totalorder %s22, 1
      %p186 = scmp.ne.s32.totalorder %s181, %s183
      %p187 = scmp.eq.s32.totalorder %s22, 0
      %p188 = por %p186, %p187
      %p189 = scmp.ne.s32.totalorder %s181, %s183
      %p190 = scmp.eq.s32.totalorder %s27, 1
      %p191 = por %p189, %p190
      %p192 = scmp.ne.s32.totalorder %s183, %s184
      %p193 = scmp.eq.s32.totalorder %s27, 0
      %p194 = por %p192, %p193
      %p195 = scmp.ne.s32.totalorder %s183, %s184
      %p196 = scmp.eq.s32.totalorder %s28, 1
      %p197 = por %p195, %p196
      %p199 = scmp.ne.s32.totalorder %s184, %s198
      %p200 = scmp.eq.s32.totalorder %s28, 0
      %p201 = por %p199, %p200
      %s202 = ssub.s32 %s22, %s29
      %p203 = scmp.eq.s32.totalorder %s202, 0
      %s205 = sadd.s32 %s204, 1
      %s206 = scalar_select %p203, %s204, %s205
      %p209 = pneg %p203
      %p210 = scmp.eq.s32.totalorder %s22, 1
      %p211 = por %p209, %p210
      %p212 = scmp.ne.s32.totalorder %s204, %s207
      %p213 = scmp.eq.s32.totalorder %s22, 0
      %p214 = por %p212, %p213
      %p215 = scmp.ne.s32.totalorder %s204, %s207
      %p216 = scmp.eq.s32.totalorder %s27, 1
      %p217 = por %p215, %p216
      %p218 = scmp.ne.s32.totalorder %s207, %s208
      %p219 = scmp.eq.s32.totalorder %s27, 0
      %p220 = por %p218, %p219
      %p221 = scmp.ne.s32.totalorder %s207, %s208
      %p222 = scmp.eq.s32.totalorder %s28, 1
      %p223 = por %p221, %p222
      %p225 = scmp.ne.s32.totalorder %s208, %s224
      %p226 = scmp.eq.s32.totalorder %s28, 0
      %p227 = por %p225, %p226
      %p228 = scmp.le.s32.totalorder 1, %s22
      %p229 = scmp.lt.s32.totalorder %s22, 3
      %p230 = pnand %p228, %p229
      %p231 = pneg %p230
      // Predicated region
      $region9: #{tpu_custom_call.1} parent=5 // pred_check
        _
      $region10: #{tpu_custom_call.1} parent=5 // pred_check_branch
        %233 = sbr.rel (%p230) target = $region12
      $region11: #{tpu_custom_call.1} parent=5 // pred_region
        %s234 = ssub.s32 %s22, 1
        // Predicated region
        $region13: #{tpu_custom_call.1} parent=11 // pred_check
          %p235 = pneg %p173
        $region14: #{tpu_custom_call.1} parent=11 // pred_check_branch
          %237 = sbr.rel (%p235) target = $region16
        $region15: #{tpu_custom_call.1} parent=11 // pred_region
          %s239 = ssub.s32 2560, 2560
          %240 = vsyncadd [#allocation6], %s239
          %s241 = sshll.u32 [#allocation7], 4
          %s242 = int_to_ptr.vmem [resolvable:$true] %s241
          %247 = dma.hbm_to_vmem [thread:$0]  %s5, 2560, %s242, [#allocation6], 128, 128, 8
        $region16: #{tpu_custom_call.1} parent=11 // pred_fallthru
          _
        // Predicated region
        $region17: #{tpu_custom_call.1} parent=11 // pred_check
          %p248 = pneg %p194
        $region18: #{tpu_custom_call.1} parent=11 // pred_check_branch
          %250 = sbr.rel (%p248) target = $region20
        $region19: #{tpu_custom_call.1} parent=11 // pred_region
          _
        $region20: #{tpu_custom_call.1} parent=11 // pred_fallthru
          _
      $region12: #{tpu_custom_call.1} parent=5 // pred_fallthru
        _
      %p251 = scmp.lt.s32.totalorder %s22, 2
      // Predicated region
      $region21: #{tpu_custom_call.1} parent=5 // pred_check
        %p252 = pneg %p251
      $region22: #{tpu_custom_call.1} parent=5 // pred_check_branch
        %254 = sbr.rel (%p252) target = $region24
      $region23: #{tpu_custom_call.1} parent=5 // pred_region
        // Predicated region
        $region25: #{tpu_custom_call.1} parent=23 // pred_check
          %p255 = pneg %p42
        $region26: #{tpu_custom_call.1} parent=23 // pred_check_branch
          %257 = sbr.rel (%p255) target = $region28
        $region27: #{tpu_custom_call.1} parent=23 // pred_region
          %s258 = sand.u32 %s32, 1
          %s259 = scalar_lea.sflag [#allocation3], %s258
          %s260 = sand.u32 %s32, 1
          %s261 = smul.addr %s260, 64
          %s262 = scalar_lea.vmem [#allocation2], %s261
          %s263 = smul.u32 8, %s22
          %s265 = ssub.s32 1024, 1024
          %266 = vsyncadd %s259, %s265
          %s267 = smul.addr %s263, 128
          %s268 = scalar_lea.hbm %s0, %s267
          %s269 = sshll.u32 %s262, 4
          %s270 = int_to_ptr.vmem [resolvable:$true] %s269
          %275 = dma.hbm_to_vmem [thread:$0]  %s268, 1024, %s270, %s259, 128, 128, 8
        $region28: #{tpu_custom_call.1} parent=23 // pred_fallthru
          _
        // Predicated region
        $region29: #{tpu_custom_call.1} parent=23 // pred_check
          %p276 = pneg %p68
        $region30: #{tpu_custom_call.1} parent=23 // pred_check_branch
          %278 = sbr.rel (%p276) target = $region32
        $region31: #{tpu_custom_call.1} parent=23 // pred_region
          %p279 = scmp.lt.s32.totalorder %s22, 1
          %s280 = scalar_select %p279, %s22, 1
          %s281 = smul.addr %s280, 8
          %s282 = scalar_lea.vmem %s1, %s281
        $region32: #{tpu_custom_call.1} parent=23 // pred_fallthru
          _
        // Predicated region
        $region33: #{tpu_custom_call.1} parent=23 // pred_check
          %p283 = pneg %p94
        $region34: #{tpu_custom_call.1} parent=23 // pred_check_branch
          %285 = sbr.rel (%p283) target = $region36
        $region35: #{tpu_custom_call.1} parent=23 // pred_region
          %s286 = sand.u32 %s22, 1
          %s287 = scalar_lea.sflag [#allocation6], %s286
          %s288 = sand.u32 %s84, 1
          %s289 = smul.addr %s288, 64
          %s290 = scalar_lea.vmem [#allocation5], %s289
          %s291 = smul.u32 8, %s22
          %s293 = ssub.s32 1024, 1024
          %294 = vsyncadd %s287, %s293
          %s295 = smul.addr %s291, 128
          %s296 = scalar_lea.hbm %s2, %s295
          %s297 = sshll.u32 %s290, 4
          %s298 = int_to_ptr.vmem [resolvable:$true] %s297
          %303 = dma.hbm_to_vmem [thread:$0]  %s296, 1024, %s298, %s287, 128, 128, 8
        $region36: #{tpu_custom_call.1} parent=23 // pred_fallthru
          _
        // Predicated region
        $region37: #{tpu_custom_call.1} parent=23 // pred_check
          %p304 = pneg %p120
        $region38: #{tpu_custom_call.1} parent=23 // pred_check_branch
          %306 = sbr.rel (%p304) target = $region40
        $region39: #{tpu_custom_call.1} parent=23 // pred_region
          %p307 = scmp.lt.s32.totalorder %s22, 1
          %s308 = scalar_select %p307, %s22, 1
          %s309 = smul.addr %s308, 8
          %s310 = scalar_lea.vmem %s3, %s309
        $region40: #{tpu_custom_call.1} parent=23 // pred_fallthru
          _
        // Predicated region
        $region41: #{tpu_custom_call.1} parent=23 // pred_check
          %p311 = pneg %p146
        $region42: #{tpu_custom_call.1} parent=23 // pred_check_branch
          %313 = sbr.rel (%p311) target = $region44
        $region43: #{tpu_custom_call.1} parent=23 // pred_region
          %p314 = scmp.lt.s32.totalorder %s22, 1
          %s315 = scalar_select %p314, %s22, 1
          %s316 = smul.addr %s315, 8
          %s317 = scalar_lea.vmem %s4, %s316
        $region44: #{tpu_custom_call.1} parent=23 // pred_fallthru
          _
      $region24: #{tpu_custom_call.1} parent=5 // pred_fallthru
        _
      %p318 = scmp.le.s32.totalorder 1, %s22
      %p319 = scmp.lt.s32.totalorder %s22, 3
      %p320 = pnand %p318, %p319
      %p321 = pneg %p320
      // Predicated region
      $region45: #{tpu_custom_call.1} parent=5 // pred_check
        _
      $region46: #{tpu_custom_call.1} parent=5 // pred_check_branch
        %323 = sbr.rel (%p320) target = $region48
      $region47: #{tpu_custom_call.1} parent=5 // pred_region
        %s324 = ssub.s32 %s22, 1
        %s325 = sand.u32 %s35, 1
        %s326 = scalar_lea.sflag [#allocation3], %s325
        %s327 = sand.u32 %s35, 1
        %s328 = smul.addr %s327, 64
        %s329 = scalar_lea.vmem [#allocation2], %s328
        // Predicated region
        $region49: #{tpu_custom_call.1} parent=47 // pred_check
          %p330 = pneg %p48
        $region50: #{tpu_custom_call.1} parent=47 // pred_check_branch
          %332 = sbr.rel (%p330) target = $region52
        $region51: #{tpu_custom_call.1} parent=47 // pred_region
          %333 = dma.done %s326, 1024
        $region52: #{tpu_custom_call.1} parent=47 // pred_fallthru
          _
        %s334 = sand.u32 %s27, 1
        %s335 = scalar_lea.sflag [#allocation6], %s334
        %s336 = sand.u32 %s87, 1
        %s337 = smul.addr %s336, 64
        %s338 = scalar_lea.vmem [#allocation5], %s337
        // Predicated region
        $region53: #{tpu_custom_call.1} parent=47 // pred_check
          %p339 = pneg %p100
        $region54: #{tpu_custom_call.1} parent=47 // pred_check_branch
          %341 = sbr.rel (%p339) target = $region56
        $region55: #{tpu_custom_call.1} parent=47 // pred_region
          %342 = dma.done %s335, 1024
        $region56: #{tpu_custom_call.1} parent=47 // pred_fallthru
          _
        // Predicated region
        $region57: #{tpu_custom_call.1} parent=47 // pred_check
          %p343 = pneg %p173
        $region58: #{tpu_custom_call.1} parent=47 // pred_check_branch
          %345 = sbr.rel (%p343) target = $region60
        $region59: #{tpu_custom_call.1} parent=47 // pred_region
          %346 = dma.done [#allocation6], 2560
        $region60: #{tpu_custom_call.1} parent=47 // pred_fallthru
          _
        %s347 = sand.u32 %s35, 1
        %s348 = scalar_lea.sflag [#allocation3], %s347
        %s349 = sand.u32 %s35, 1
        %s350 = smul.addr %s349, 64
        %s351 = scalar_lea.vmem [#allocation2], %s350
        %p352 = pneg %p48
        %p353 = pneg %p45
        %p354 = scmp.lt.s32.totalorder %s27, 1
        %s355 = scalar_select %p354, %s27, 1
        %s356 = smul.addr %s355, 8
        %s357 = scalar_lea.vmem %s1, %s356
        %p358 = pneg %p74
        %p359 = pneg %p71
        %s360 = sand.u32 %s27, 1
        %s361 = scalar_lea.sflag [#allocation6], %s360
        %s362 = sand.u32 %s87, 1
        %s363 = smul.addr %s362, 64
        %s364 = scalar_lea.vmem [#allocation5], %s363
        %p365 = pneg %p100
        %p366 = pneg %p97
        %p367 = scmp.lt.s32.totalorder %s27, 1
        %s368 = scalar_select %p367, %s27, 1
        %s369 = smul.addr %s368, 8
        %s370 = scalar_lea.vmem %s3, %s369
        %p371 = pneg %p126
        %p372 = pneg %p123
        %p373 = scmp.lt.s32.totalorder %s27, 1
        %s374 = scalar_select %p373, %s27, 1
        %s375 = smul.addr %s374, 8
        %s376 = scalar_lea.vmem %s4, %s375
        %p377 = pneg %p152
        %p378 = pneg %p149
        %p379 = pneg %p173
        %p380 = pneg %p170
        %p381 = pneg %p194
        %p382 = pneg %p191
        %p383 = pneg %p220
        %p384 = pneg %p217
        %s385 = sand.u32 %s207, 1
        %s386 = scalar_lea.sflag [#allocation4], %s385
        %s387 = sand.u32 %s207, 1
        %s388 = smul.addr %s387, 8
        %s389 = scalar_lea.vmem [#allocation8], %s388
        %s390 = smul.u32 8, %s27
        %p391 = scmp.lt.s32.totalorder %s27, 1
        %s392 = scalar_select %p391, %s27, 1
        %s393 = smul.addr %s392, 8
        %s394 = scalar_lea.vmem %s1, %s393
        %s395 = smul.u32 8, %s27
        %p396 = scmp.lt.s32.totalorder %s27, 1
        %s397 = scalar_select %p396, %s27, 1
        %s398 = smul.addr %s397, 8
        %s399 = scalar_lea.vmem %s3, %s398
        %p400 = scmp.lt.s32.totalorder %s27, 1
        %s401 = scalar_select %p400, %s27, 1
        %s402 = smul.addr %s401, 8
        %s403 = scalar_lea.vmem %s4, %s402
        %v404 = vld [vmem:[%s329] sm:$0xff]
        %v405 = vld [vmem:[%s329 + $0x8] sm:$0xff]
        %v406 = vld [vmem:[%s329 + $0x10] sm:$0xff]
        %v407 = vld [vmem:[%s329 + $0x18] sm:$0xff]
        %v408 = vld [vmem:[%s329 + $0x20] sm:$0xff]
        %v409 = vld [vmem:[%s329 + $0x28] sm:$0xff]
        %v410 = vld [vmem:[%s329 + $0x30] sm:$0xff]
        %v411 = vld [vmem:[%s329 + $0x38] sm:$0xff]
        %v412 = vld [vmem:[%s338] sm:$0xff]
        %v413 = vld [vmem:[%s338 + $0x8] sm:$0xff]
        %v414 = vld [vmem:[%s338 + $0x10] sm:$0xff]
        %v415 = vld [vmem:[%s338 + $0x18] sm:$0xff]
        %v416 = vld [vmem:[%s338 + $0x20] sm:$0xff]
        %v417 = vld [vmem:[%s338 + $0x28] sm:$0xff]
        %v418 = vld [vmem:[%s338 + $0x30] sm:$0xff]
        %v419 = vld [vmem:[%s338 + $0x38] sm:$0xff]
        %v420 = vld [vmem:[%s394] sm:$0xff]
        %v421 = vld [vmem:[%s399] sm:$0xff]
        %v422 = vld [vmem:[%s403] sm:$0xff]
        %vm423 = vcmask 261120
        %v424 = vsel %vm423, %v404, 0.0
        %425 = vadd.xlane.f32.xlu0 %v424
        %v426 = vpop.xlane.xlu0 %425
        %v427 = vsel %vm423, %v405, 0.0
        %428 = vadd.xlane.f32.xlu0 %v427
        %v429 = vpop.xlane.xlu0 %428
        %v430 = vsel %vm423, %v406, 0.0
        %431 = vadd.xlane.f32.xlu0 %v430
        %v432 = vpop.xlane.xlu0 %431
        %v433 = vsel %vm423, %v407, 0.0
        %434 = vadd.xlane.f32.xlu0 %v433
        %v435 = vpop.xlane.xlu0 %434
        %v436 = vsel %vm423, %v408, 0.0
        %437 = vadd.xlane.f32.xlu0 %v436
        %v438 = vpop.xlane.xlu0 %437
        %v439 = vsel %vm423, %v409, 0.0
        %440 = vadd.xlane.f32.xlu0 %v439
        %v441 = vpop.xlane.xlu0 %440
        %v442 = vsel %vm423, %v410, 0.0
        %443 = vadd.xlane.f32.xlu0 %v442
        %v444 = vpop.xlane.xlu0 %443
        %v445 = vsel %vm423, %v411, 0.0
        %446 = vadd.xlane.f32.xlu0 %v445
        %v447 = vpop.xlane.xlu0 %446
        %v448 = vrcp.pop 32.0
        %v449 = vmul.f32 %v426, %v448
        %v450 = vmul.f32 %v429, %v448
        %v451 = vmul.f32 %v432, %v448
        %v452 = vmul.f32 %v435, %v448
        %v453 = vmul.f32 %v438, %v448
        %v454 = vmul.f32 %v441, %v448
        %v455 = vmul.f32 %v444, %v448
        %v456 = vmul.f32 %v447, %v448
        %v457 = vsub.f32 %v404, %v449
        %v458 = vsub.f32 %v405, %v450
        %v459 = vsub.f32 %v406, %v451
        %v460 = vsub.f32 %v407, %v452
        %v461 = vsub.f32 %v408, %v453
        %v462 = vsub.f32 %v409, %v454
        %v463 = vsub.f32 %v410, %v455
        %v464 = vsub.f32 %v411, %v456
        %v465 = vmul.f32 %v457, %v457
        %v466 = vmul.f32 %v458, %v458
        %v467 = vmul.f32 %v459, %v459
        %v468 = vmul.f32 %v460, %v460
        %v469 = vmul.f32 %v461, %v461
        %v470 = vmul.f32 %v462, %v462
        %v471 = vmul.f32 %v463, %v463
        %v472 = vmul.f32 %v464, %v464
        %v473 = vsel %vm423, %v465, 0.0
        %474 = vadd.xlane.f32.xlu0 %v473
        %v475 = vpop.xlane.xlu0 %474
        %v476 = vsel %vm423, %v466, 0.0
        %477 = vadd.xlane.f32.xlu0 %v476
        %v478 = vpop.xlane.xlu0 %477
        %v479 = vsel %vm423, %v467, 0.0
        %480 = vadd.xlane.f32.xlu0 %v479
        %v481 = vpop.xlane.xlu0 %480
        %v482 = vsel %vm423, %v468, 0.0
        %483 = vadd.xlane.f32.xlu0 %v482
        %v484 = vpop.xlane.xlu0 %483
        %v485 = vsel %vm423, %v469, 0.0
        %486 = vadd.xlane.f32.xlu0 %v485
        %v487 = vpop.xlane.xlu0 %486
        %v488 = vsel %vm423, %v470, 0.0
        %489 = vadd.xlane.f32.xlu0 %v488
        %v490 = vpop.xlane.xlu0 %489
        %v491 = vsel %vm423, %v471, 0.0
        %492 = vadd.xlane.f32.xlu0 %v491
        %v493 = vpop.xlane.xlu0 %492
        %v494 = vsel %vm423, %v472, 0.0
        %495 = vadd.xlane.f32.xlu0 %v494
        %v496 = vpop.xlane.xlu0 %495
        %v497 = vmul.f32 %v475, %v448
        %v498 = vmul.f32 %v478, %v448
        %v499 = vmul.f32 %v481, %v448
        %v500 = vmul.f32 %v484, %v448
        %v501 = vmul.f32 %v487, %v448
        %v502 = vmul.f32 %v490, %v448
        %v503 = vmul.f32 %v493, %v448
        %v504 = vmul.f32 %v496, %v448
        %v505 = vadd.f32 %v497, 1e-05
        %v506 = vadd.f32 %v498, 1e-05
        %v507 = vadd.f32 %v499, 1e-05
        %v508 = vadd.f32 %v500, 1e-05
        %v509 = vadd.f32 %v501, 1e-05
        %v510 = vadd.f32 %v502, 1e-05
        %v511 = vadd.f32 %v503, 1e-05
        %v512 = vadd.f32 %v504, 1e-05
        %v513 = vrsqrt.pop %v505
        %v514 = vrsqrt.pop %v506
        %v515 = vrsqrt.pop %v507
        %v516 = vrsqrt.pop %v508
        %v517 = vrsqrt.pop %v509
        %v518 = vrsqrt.pop %v510
        %v519 = vrsqrt.pop %v511
        %v520 = vrsqrt.pop %v512
        %v521 = vmul.f32 %v457, %v513
        %v522 = vmul.f32 %v458, %v514
        %v523 = vmul.f32 %v459, %v515
        %v524 = vmul.f32 %v460, %v516
        %v525 = vmul.f32 %v461, %v517
        %v526 = vmul.f32 %v462, %v518
        %v527 = vmul.f32 %v463, %v519
        %v528 = vmul.f32 %v464, %v520
        %v529 = vsel %vm423, %v412, 0.0
        %530 = vadd.xlane.f32.xlu0 %v529
        %v531 = vpop.xlane.xlu0 %530
        %v532 = vsel %vm423, %v413, 0.0
        %533 = vadd.xlane.f32.xlu0 %v532
        %v534 = vpop.xlane.xlu0 %533
        %v535 = vsel %vm423, %v414, 0.0
        %536 = vadd.xlane.f32.xlu0 %v535
        %v537 = vpop.xlane.xlu0 %536
        %v538 = vsel %vm423, %v415, 0.0
        %539 = vadd.xlane.f32.xlu0 %v538
        %v540 = vpop.xlane.xlu0 %539
        %v541 = vsel %vm423, %v416, 0.0
        %542 = vadd.xlane.f32.xlu0 %v541
        %v543 = vpop.xlane.xlu0 %542
        %v544 = vsel %vm423, %v417, 0.0
        %545 = vadd.xlane.f32.xlu0 %v544
        %v546 = vpop.xlane.xlu0 %545
        %v547 = vsel %vm423, %v418, 0.0
        %548 = vadd.xlane.f32.xlu0 %v547
        %v549 = vpop.xlane.xlu0 %548
        %v550 = vsel %vm423, %v419, 0.0
        %551 = vadd.xlane.f32.xlu0 %v550
        %v552 = vpop.xlane.xlu0 %551
        %v553 = vmul.f32 %v531, %v448
        %v554 = vmul.f32 %v534, %v448
        %v555 = vmul.f32 %v537, %v448
        %v556 = vmul.f32 %v540, %v448
        %v557 = vmul.f32 %v543, %v448
        %v558 = vmul.f32 %v546, %v448
        %v559 = vmul.f32 %v549, %v448
        %v560 = vmul.f32 %v552, %v448
        %v561 = vsub.f32 %v412, %v553
        %v562 = vsub.f32 %v413, %v554
        %v563 = vsub.f32 %v414, %v555
        %v564 = vsub.f32 %v415, %v556
        %v565 = vsub.f32 %v416, %v557
        %v566 = vsub.f32 %v417, %v558
        %v567 = vsub.f32 %v418, %v559
        %v568 = vsub.f32 %v419, %v560
        %v569 = vmul.f32 %v561, %v561
        %v570 = vmul.f32 %v562, %v562
        %v571 = vmul.f32 %v563, %v563
        %v572 = vmul.f32 %v564, %v564
        %v573 = vmul.f32 %v565, %v565
        %v574 = vmul.f32 %v566, %v566
        %v575 = vmul.f32 %v567, %v567
        %v576 = vmul.f32 %v568, %v568
        %v577 = vsel %vm423, %v569, 0.0
        %578 = vadd.xlane.f32.xlu0 %v577
        %v579 = vpop.xlane.xlu0 %578
        %v580 = vsel %vm423, %v570, 0.0
        %581 = vadd.xlane.f32.xlu0 %v580
        %v582 = vpop.xlane.xlu0 %581
        %v583 = vsel %vm423, %v571, 0.0
        %584 = vadd.xlane.f32.xlu0 %v583
        %v585 = vpop.xlane.xlu0 %584
        %v586 = vsel %vm423, %v572, 0.0
        %587 = vadd.xlane.f32.xlu0 %v586
        %v588 = vpop.xlane.xlu0 %587
        %v589 = vsel %vm423, %v573, 0.0
        %590 = vadd.xlane.f32.xlu0 %v589
        %v591 = vpop.xlane.xlu0 %590
        %v592 = vsel %vm423, %v574, 0.0
        %593 = vadd.xlane.f32.xlu0 %v592
        %v594 = vpop.xlane.xlu0 %593
        %v595 = vsel %vm423, %v575, 0.0
        %596 = vadd.xlane.f32.xlu0 %v595
        %v597 = vpop.xlane.xlu0 %596
        %v598 = vsel %vm423, %v576, 0.0
        %599 = vadd.xlane.f32.xlu0 %v598
        %v600 = vpop.xlane.xlu0 %599
        %v601 = vmul.f32 %v579, %v448
        %v602 = vmul.f32 %v582, %v448
        %v603 = vmul.f32 %v585, %v448
        %v604 = vmul.f32 %v588, %v448
        %v605 = vmul.f32 %v591, %v448
        %v606 = vmul.f32 %v594, %v448
        %v607 = vmul.f32 %v597, %v448
        %v608 = vmul.f32 %v600, %v448
        %v609 = vadd.f32 %v601, 1e-05
        %v610 = vadd.f32 %v602, 1e-05
        %v611 = vadd.f32 %v603, 1e-05
        %v612 = vadd.f32 %v604, 1e-05
        %v613 = vadd.f32 %v605, 1e-05
        %v614 = vadd.f32 %v606, 1e-05
        %v615 = vadd.f32 %v607, 1e-05
        %v616 = vadd.f32 %v608, 1e-05
        %v617 = vrsqrt.pop %v609
        %v618 = vrsqrt.pop %v610
        %v619 = vrsqrt.pop %v611
        %v620 = vrsqrt.pop %v612
        %v621 = vrsqrt.pop %v613
        %v622 = vrsqrt.pop %v614
        %v623 = vrsqrt.pop %v615
        %v624 = vrsqrt.pop %v616
        %v625 = vmul.f32 %v561, %v617
        %v626 = vmul.f32 %v562, %v618
        %v627 = vmul.f32 %v563, %v619
        %v628 = vmul.f32 %v564, %v620
        %v629 = vmul.f32 %v565, %v621
        %v630 = vmul.f32 %v566, %v622
        %v631 = vmul.f32 %v567, %v623
        %v632 = vmul.f32 %v568, %v624
        %v634 = vcombine.high %v422, %v422
        %v636 = vunpack.c.l.s4 1966171168
        %v637 = vunpack.c.0.s8 %v636
        %v638 = vlaneseq
        %v639 = vshrl.u32 %v638, 7
        %v640 = vsub.s32 %v637, %v639
        %v641 = vrot.slane %v422, %v640
        %v643 = vunpack.c.l.s4 1966171168
        %v644 = vunpack.c.0.s8 %v643
        %v645 = vlaneseq
        %v646 = vshrl.u32 %v645, 7
        %v647 = vsub.s32 %v644, %v646
        %v648 = vrot.slane %v634, %v647
        %v649 = vcombine.high %v641, %v641
        %v650 = vcombine.high %v648, %v648
        %v652 = vunpack.c.l.s4 1966171168
        %v653 = vunpack.c.0.s8 %v652
        %v654 = vlaneseq
        %v655 = vshrl.u32 %v654, 7
        %v656 = vsub.s32 %v653, %v655
        %v657 = vrot.slane %v641, %v656
        %v659 = vunpack.c.l.s4 1966171168
        %v660 = vunpack.c.0.s8 %v659
        %v661 = vlaneseq
        %v662 = vshrl.u32 %v661, 7
        %v663 = vsub.s32 %v660, %v662
        %v664 = vrot.slane %v648, %v663
        %v666 = vunpack.c.l.s4 1966171168
        %v667 = vunpack.c.0.s8 %v666
        %v668 = vlaneseq
        %v669 = vshrl.u32 %v668, 7
        %v670 = vsub.s32 %v667, %v669
        %v671 = vrot.slane %v649, %v670
        %v673 = vunpack.c.l.s4 1966171168
        %v674 = vunpack.c.0.s8 %v673
        %v675 = vlaneseq
        %v676 = vshrl.u32 %v675, 7
        %v677 = vsub.s32 %v674, %v676
        %v678 = vrot.slane %v650, %v677
        %v679 = vcombine.high %v657, %v657
        %v680 = vcombine.high %v664, %v664
        %v681 = vcombine.high %v671, %v671
        %v682 = vcombine.high %v678, %v678
        %v683 = vlaneseq
        %v684 = vshrl.u32 %v683, 7
        %v685 = vsub.s32 0, %v684
        %v686 = vrot.slane %v657, %v685
        %v687 = vlaneseq
        %v688 = vshrl.u32 %v687, 7
        %v689 = vsub.s32 0, %v688
        %v690 = vrot.slane %v671, %v689
        %v691 = vlaneseq
        %v692 = vshrl.u32 %v691, 7
        %v693 = vsub.s32 0, %v692
        %v694 = vrot.slane %v679, %v693
        %v695 = vlaneseq
        %v696 = vshrl.u32 %v695, 7
        %v697 = vsub.s32 0, %v696
        %v698 = vrot.slane %v681, %v697
        %v699 = vlaneseq
        %v700 = vshrl.u32 %v699, 7
        %v701 = vsub.s32 0, %v700
        %v702 = vrot.slane %v664, %v701
        %v703 = vlaneseq
        %v704 = vshrl.u32 %v703, 7
        %v705 = vsub.s32 0, %v704
        %v706 = vrot.slane %v678, %v705
        %v707 = vlaneseq
        %v708 = vshrl.u32 %v707, 7
        %v709 = vsub.s32 0, %v708
        %v710 = vrot.slane %v680, %v709
        %v711 = vlaneseq
        %v712 = vshrl.u32 %v711, 7
        %v713 = vsub.s32 0, %v712
        %v714 = vrot.slane %v682, %v713
        %v723 = vmul.f32 %v521, %v686
        %v724 = vmul.f32 %v522, %v690
        %v725 = vmul.f32 %v523, %v694
        %v726 = vmul.f32 %v524, %v698
        %v727 = vmul.f32 %v525, %v702
        %v728 = vmul.f32 %v526, %v706
        %v729 = vmul.f32 %v527, %v710
        %v730 = vmul.f32 %v528, %v714
        %v731 = vsel %vm423, %v723, 0.0
        %732 = vadd.xlane.f32.xlu0 %v731
        %v733 = vpop.xlane.xlu0 %732
        %v734 = vsel %vm423, %v724, 0.0
        %735 = vadd.xlane.f32.xlu0 %v734
        %v736 = vpop.xlane.xlu0 %735
        %v737 = vsel %vm423, %v725, 0.0
        %738 = vadd.xlane.f32.xlu0 %v737
        %v739 = vpop.xlane.xlu0 %738
        %v740 = vsel %vm423, %v726, 0.0
        %741 = vadd.xlane.f32.xlu0 %v740
        %v742 = vpop.xlane.xlu0 %741
        %v743 = vsel %vm423, %v727, 0.0
        %744 = vadd.xlane.f32.xlu0 %v743
        %v745 = vpop.xlane.xlu0 %744
        %v746 = vsel %vm423, %v728, 0.0
        %747 = vadd.xlane.f32.xlu0 %v746
        %v748 = vpop.xlane.xlu0 %747
        %v749 = vsel %vm423, %v729, 0.0
        %750 = vadd.xlane.f32.xlu0 %v749
        %v751 = vpop.xlane.xlu0 %750
        %v752 = vsel %vm423, %v730, 0.0
        %753 = vadd.xlane.f32.xlu0 %v752
        %v754 = vpop.xlane.xlu0 %753
        %v755 = vmul.f32 %v733, 0.17677669
        %v756 = vmul.f32 %v736, 0.17677669
        %v757 = vmul.f32 %v739, 0.17677669
        %v758 = vmul.f32 %v742, 0.17677669
        %v759 = vmul.f32 %v745, 0.17677669
        %v760 = vmul.f32 %v748, 0.17677669
        %v761 = vmul.f32 %v751, 0.17677669
        %v762 = vmul.f32 %v754, 0.17677669
        %v763 = vmul.f32 %v625, %v686
        %v764 = vmul.f32 %v626, %v690
        %v765 = vmul.f32 %v627, %v694
        %v766 = vmul.f32 %v628, %v698
        %v767 = vmul.f32 %v629, %v702
        %v768 = vmul.f32 %v630, %v706
        %v769 = vmul.f32 %v631, %v710
        %v770 = vmul.f32 %v632, %v714
        %v771 = vsel %vm423, %v763, 0.0
        %772 = vadd.xlane.f32.xlu0 %v771
        %v773 = vpop.xlane.xlu0 %772
        %v774 = vsel %vm423, %v764, 0.0
        %775 = vadd.xlane.f32.xlu0 %v774
        %v776 = vpop.xlane.xlu0 %775
        %v777 = vsel %vm423, %v765, 0.0
        %778 = vadd.xlane.f32.xlu0 %v777
        %v779 = vpop.xlane.xlu0 %778
        %v780 = vsel %vm423, %v766, 0.0
        %781 = vadd.xlane.f32.xlu0 %v780
        %v782 = vpop.xlane.xlu0 %781
        %v783 = vsel %vm423, %v767, 0.0
        %784 = vadd.xlane.f32.xlu0 %v783
        %v785 = vpop.xlane.xlu0 %784
        %v786 = vsel %vm423, %v768, 0.0
        %787 = vadd.xlane.f32.xlu0 %v786
        %v788 = vpop.xlane.xlu0 %787
        %v789 = vsel %vm423, %v769, 0.0
        %790 = vadd.xlane.f32.xlu0 %v789
        %v791 = vpop.xlane.xlu0 %790
        %v792 = vsel %vm423, %v770, 0.0
        %793 = vadd.xlane.f32.xlu0 %v792
        %v794 = vpop.xlane.xlu0 %793
        %v795 = vmul.f32 %v773, 0.17677669
        %v796 = vmul.f32 %v776, 0.17677669
        %v797 = vmul.f32 %v779, 0.17677669
        %v798 = vmul.f32 %v782, 0.17677669
        %v799 = vmul.f32 %v785, 0.17677669
        %v800 = vmul.f32 %v788, 0.17677669
        %v801 = vmul.f32 %v791, 0.17677669
        %v802 = vmul.f32 %v794, 0.17677669
        %v803 = vmul.f32 %v755, 1.442695
        %v804 = vpow.pop %v803
        %v805 = vmul.f32 %v756, 1.442695
        %v806 = vpow.pop %v805
        %v807 = vmul.f32 %v757, 1.442695
        %v808 = vpow.pop %v807
        %v809 = vmul.f32 %v758, 1.442695
        %v810 = vpow.pop %v809
        %v811 = vmul.f32 %v759, 1.442695
        %v812 = vpow.pop %v811
        %v813 = vmul.f32 %v760, 1.442695
        %v814 = vpow.pop %v813
        %v815 = vmul.f32 %v761, 1.442695
        %v816 = vpow.pop %v815
        %v817 = vmul.f32 %v762, 1.442695
        %v818 = vpow.pop %v817
        %v820 = vlaneseq
        %v821 = vshrl.u32 %v820, 7
        %v822 = vsub.s32 0, %v821
        %v823 = vrot.slane %v420, %v822
        %825 = vbcast.lane.b32.xlu0 %v823, 256
        %v826 = vpop.permute.xlu0 %825
        %v827 = vlaneseq
        %v828 = vshrl.u32 %v827, 7
        %v829 = vsub.s32 1, %v828
        %v830 = vrot.slane %v420, %v829
        %832 = vbcast.lane.b32.xlu0 %v830, 256
        %v833 = vpop.permute.xlu0 %832
        %v834 = vlaneseq
        %v835 = vshrl.u32 %v834, 7
        %v836 = vsub.s32 2, %v835
        %v837 = vrot.slane %v420, %v836
        %839 = vbcast.lane.b32.xlu0 %v837, 256
        %v840 = vpop.permute.xlu0 %839
        %v841 = vlaneseq
        %v842 = vshrl.u32 %v841, 7
        %v843 = vsub.s32 3, %v842
        %v844 = vrot.slane %v420, %v843
        %846 = vbcast.lane.b32.xlu0 %v844, 256
        %v847 = vpop.permute.xlu0 %846
        %v848 = vlaneseq
        %v849 = vshrl.u32 %v848, 7
        %v850 = vsub.s32 4, %v849
        %v851 = vrot.slane %v420, %v850
        %853 = vbcast.lane.b32.xlu0 %v851, 256
        %v854 = vpop.permute.xlu0 %853
        %v855 = vlaneseq
        %v856 = vshrl.u32 %v855, 7
        %v857 = vsub.s32 5, %v856
        %v858 = vrot.slane %v420, %v857
        %860 = vbcast.lane.b32.xlu0 %v858, 256
        %v861 = vpop.permute.xlu0 %860
        %v862 = vlaneseq
        %v863 = vshrl.u32 %v862, 7
        %v864 = vsub.s32 6, %v863
        %v865 = vrot.slane %v420, %v864
        %867 = vbcast.lane.b32.xlu0 %v865, 256
        %v868 = vpop.permute.xlu0 %867
        %v869 = vlaneseq
        %v870 = vshrl.u32 %v869, 7
        %v871 = vsub.s32 7, %v870
        %v872 = vrot.slane %v420, %v871
        %874 = vbcast.lane.b32.xlu0 %v872, 256
        %v875 = vpop.permute.xlu0 %874
        %v884 = vmul.f32 %v804, %v826
        %v885 = vmul.f32 %v806, %v833
        %v886 = vmul.f32 %v808, %v840
        %v887 = vmul.f32 %v810, %v847
        %v888 = vmul.f32 %v812, %v854
        %v889 = vmul.f32 %v814, %v861
        %v890 = vmul.f32 %v816, %v868
        %v891 = vmul.f32 %v818, %v875
        %900 = vset.pattern.permute.xlu0 0
        %901 = vperm.xlu0 %900, %v884
        %v902 = vpop.permute.xlu0 %901
        %903 = vset.pattern.permute.xlu0 0
        %904 = vperm.xlu0 %903, %v885
        %v905 = vpop.permute.xlu0 %904
        %906 = vset.pattern.permute.xlu0 0
        %907 = vperm.xlu0 %906, %v886
        %v908 = vpop.permute.xlu0 %907
        %909 = vset.pattern.permute.xlu0 0
        %910 = vperm.xlu0 %909, %v887
        %v911 = vpop.permute.xlu0 %910
        %912 = vset.pattern.permute.xlu0 0
        %913 = vperm.xlu0 %912, %v888
        %v914 = vpop.permute.xlu0 %913
        %915 = vset.pattern.permute.xlu0 0
        %916 = vperm.xlu0 %915, %v889
        %v917 = vpop.permute.xlu0 %916
        %918 = vset.pattern.permute.xlu0 0
        %919 = vperm.xlu0 %918, %v890
        %v920 = vpop.permute.xlu0 %919
        %921 = vset.pattern.permute.xlu0 0
        %922 = vperm.xlu0 %921, %v891
        %v923 = vpop.permute.xlu0 %922
        %v924 = vlaneseq
        %v925 = vand.u32 %v924, 127
        %v926 = vlaneseq
        %v927 = vshrl.u32 %v926, 7
        %v928 = vsub.s32 %v925, %v927
        %v929 = vrot.slane %v902, %v928
        %v930 = vlaneseq
        %v931 = vshrl.u32 %v930, 7
        %v932 = vsub.s32 %v925, %v931
        %v933 = vrot.slane %v905, %v932
        %v934 = vlaneseq
        %v935 = vshrl.u32 %v934, 7
        %v936 = vsub.s32 %v925, %v935
        %v937 = vrot.slane %v908, %v936
        %v938 = vlaneseq
        %v939 = vshrl.u32 %v938, 7
        %v940 = vsub.s32 %v925, %v939
        %v941 = vrot.slane %v911, %v940
        %v942 = vlaneseq
        %v943 = vshrl.u32 %v942, 7
        %v944 = vsub.s32 %v925, %v943
        %v945 = vrot.slane %v914, %v944
        %v946 = vlaneseq
        %v947 = vshrl.u32 %v946, 7
        %v948 = vsub.s32 %v925, %v947
        %v949 = vrot.slane %v917, %v948
        %v950 = vlaneseq
        %v951 = vshrl.u32 %v950, 7
        %v952 = vsub.s32 %v925, %v951
        %v953 = vrot.slane %v920, %v952
        %v954 = vlaneseq
        %v955 = vshrl.u32 %v954, 7
        %v956 = vsub.s32 %v925, %v955
        %v957 = vrot.slane %v923, %v956
        %vm958 = vcmask 1041409
        %v959 = vsel %vm958, %v933, %v929
        %vm960 = vcmask 1042434
        %v961 = vsel %vm960, %v937, %v959
        %vm962 = vcmask 1043459
        %v963 = vsel %vm962, %v941, %v961
        %vm964 = vcmask 1044484
        %v965 = vsel %vm964, %v945, %v963
        %vm966 = vcmask 1045509
        %v967 = vsel %vm966, %v949, %v965
        %vm968 = vcmask 1046534
        %v969 = vsel %vm968, %v953, %v967
        %vm970 = vcmask 1047559
        %v971 = vsel %vm970, %v957, %v969
        %vm973 = vcmask 64512
        %v974 = vsel %vm973, %v971, 0.0
        %975 = vadd.xlane.f32.xlu0 %v974
        %v976 = vpop.xlane.xlu0 %975
        %v977 = vadd.f32 %v976, 1e-15
        %v978 = vrcp.pop %v977
        %v980 = vlaneseq
        %v981 = vshrl.u32 %v980, 7
        %v982 = vsub.s32 0, %v981
        %v983 = vrot.slane %v978, %v982
        %v984 = vlaneseq
        %v985 = vshrl.u32 %v984, 7
        %v986 = vsub.s32 1, %v985
        %v987 = vrot.slane %v978, %v986
        %v988 = vlaneseq
        %v989 = vshrl.u32 %v988, 7
        %v990 = vsub.s32 2, %v989
        %v991 = vrot.slane %v978, %v990
        %v992 = vlaneseq
        %v993 = vshrl.u32 %v992, 7
        %v994 = vsub.s32 3, %v993
        %v995 = vrot.slane %v978, %v994
        %v996 = vlaneseq
        %v997 = vshrl.u32 %v996, 7
        %v998 = vsub.s32 4, %v997
        %v999 = vrot.slane %v978, %v998
        %v1000 = vlaneseq
        %v1001 = vshrl.u32 %v1000, 7
        %v1002 = vsub.s32 5, %v1001
        %v1003 = vrot.slane %v978, %v1002
        %v1004 = vlaneseq
        %v1005 = vshrl.u32 %v1004, 7
        %v1006 = vsub.s32 6, %v1005
        %v1007 = vrot.slane %v978, %v1006
        %v1008 = vlaneseq
        %v1009 = vshrl.u32 %v1008, 7
        %v1010 = vsub.s32 7, %v1009
        %v1011 = vrot.slane %v978, %v1010
        %v1020 = vmul.f32 %v884, %v983
        %v1021 = vmul.f32 %v885, %v987
        %v1022 = vmul.f32 %v886, %v991
        %v1023 = vmul.f32 %v887, %v995
        %v1024 = vmul.f32 %v888, %v999
        %v1025 = vmul.f32 %v889, %v1003
        %v1026 = vmul.f32 %v890, %v1007
        %v1027 = vmul.f32 %v891, %v1011
        %v1028 = vmul.f32 %v795, 1.442695
        %v1029 = vpow.pop %v1028
        %v1030 = vmul.f32 %v796, 1.442695
        %v1031 = vpow.pop %v1030
        %v1032 = vmul.f32 %v797, 1.442695
        %v1033 = vpow.pop %v1032
        %v1034 = vmul.f32 %v798, 1.442695
        %v1035 = vpow.pop %v1034
        %v1036 = vmul.f32 %v799, 1.442695
        %v1037 = vpow.pop %v1036
        %v1038 = vmul.f32 %v800, 1.442695
        %v1039 = vpow.pop %v1038
        %v1040 = vmul.f32 %v801, 1.442695
        %v1041 = vpow.pop %v1040
        %v1042 = vmul.f32 %v802, 1.442695
        %v1043 = vpow.pop %v1042
        %v1045 = vlaneseq
        %v1046 = vshrl.u32 %v1045, 7
        %v1047 = vsub.s32 0, %v1046
        %v1048 = vrot.slane %v421, %v1047
        %1050 = vbcast.lane.b32.xlu0 %v1048, 256
        %v1051 = vpop.permute.xlu0 %1050
        %v1052 = vlaneseq
        %v1053 = vshrl.u32 %v1052, 7
        %v1054 = vsub.s32 1, %v1053
        %v1055 = vrot.slane %v421, %v1054
        %1057 = vbcast.lane.b32.xlu0 %v1055, 256
        %v1058 = vpop.permute.xlu0 %1057
        %v1059 = vlaneseq
        %v1060 = vshrl.u32 %v1059, 7
        %v1061 = vsub.s32 2, %v1060
        %v1062 = vrot.slane %v421, %v1061
        %1064 = vbcast.lane.b32.xlu0 %v1062, 256
        %v1065 = vpop.permute.xlu0 %1064
        %v1066 = vlaneseq
        %v1067 = vshrl.u32 %v1066, 7
        %v1068 = vsub.s32 3, %v1067
        %v1069 = vrot.slane %v421, %v1068
        %1071 = vbcast.lane.b32.xlu0 %v1069, 256
        %v1072 = vpop.permute.xlu0 %1071
        %v1073 = vlaneseq
        %v1074 = vshrl.u32 %v1073, 7
        %v1075 = vsub.s32 4, %v1074
        %v1076 = vrot.slane %v421, %v1075
        %1078 = vbcast.lane.b32.xlu0 %v1076, 256
        %v1079 = vpop.permute.xlu0 %1078
        %v1080 = vlaneseq
        %v1081 = vshrl.u32 %v1080, 7
        %v1082 = vsub.s32 5, %v1081
        %v1083 = vrot.slane %v421, %v1082
        %1085 = vbcast.lane.b32.xlu0 %v1083, 256
        %v1086 = vpop.permute.xlu0 %1085
        %v1087 = vlaneseq
        %v1088 = vshrl.u32 %v1087, 7
        %v1089 = vsub.s32 6, %v1088
        %v1090 = vrot.slane %v421, %v1089
        %1092 = vbcast.lane.b32.xlu0 %v1090, 256
        %v1093 = vpop.permute.xlu0 %1092
        %v1094 = vlaneseq
        %v1095 = vshrl.u32 %v1094, 7
        %v1096 = vsub.s32 7, %v1095
        %v1097 = vrot.slane %v421, %v1096
        %1099 = vbcast.lane.b32.xlu0 %v1097, 256
        %v1100 = vpop.permute.xlu0 %1099
        %v1109 = vmul.f32 %v1029, %v1051
        %v1110 = vmul.f32 %v1031, %v1058
        %v1111 = vmul.f32 %v1033, %v1065
        %v1112 = vmul.f32 %v1035, %v1072
        %v1113 = vmul.f32 %v1037, %v1079
        %v1114 = vmul.f32 %v1039, %v1086
        %v1115 = vmul.f32 %v1041, %v1093
        %v1116 = vmul.f32 %v1043, %v1100
        %1125 = vset.pattern.permute.xlu0 0
        %1126 = vperm.xlu0 %1125, %v1109
        %v1127 = vpop.permute.xlu0 %1126
        %1128 = vset.pattern.permute.xlu0 0
        %1129 = vperm.xlu0 %1128, %v1110
        %v1130 = vpop.permute.xlu0 %1129
        %1131 = vset.pattern.permute.xlu0 0
        %1132 = vperm.xlu0 %1131, %v1111
        %v1133 = vpop.permute.xlu0 %1132
        %1134 = vset.pattern.permute.xlu0 0
        %1135 = vperm.xlu0 %1134, %v1112
        %v1136 = vpop.permute.xlu0 %1135
        %1137 = vset.pattern.permute.xlu0 0
        %1138 = vperm.xlu0 %1137, %v1113
        %v1139 = vpop.permute.xlu0 %1138
        %1140 = vset.pattern.permute.xlu0 0
        %1141 = vperm.xlu0 %1140, %v1114
        %v1142 = vpop.permute.xlu0 %1141
        %1143 = vset.pattern.permute.xlu0 0
        %1144 = vperm.xlu0 %1143, %v1115
        %v1145 = vpop.permute.xlu0 %1144
        %1146 = vset.pattern.permute.xlu0 0
        %1147 = vperm.xlu0 %1146, %v1116
        %v1148 = vpop.permute.xlu0 %1147
        %v1149 = vlaneseq
        %v1150 = vshrl.u32 %v1149, 7
        %v1151 = vsub.s32 %v925, %v1150
        %v1152 = vrot.slane %v1127, %v1151
        %v1153 = vlaneseq
        %v1154 = vshrl.u32 %v1153, 7
        %v1155 = vsub.s32 %v925, %v1154
        %v1156 = vrot.slane %v1130, %v1155
        %v1157 = vlaneseq
        %v1158 = vshrl.u32 %v1157, 7
        %v1159 = vsub.s32 %v925, %v1158
        %v1160 = vrot.slane %v1133, %v1159
        %v1161 = vlaneseq
        %v1162 = vshrl.u32 %v1161, 7
        %v1163 = vsub.s32 %v925, %v1162
        %v1164 = vrot.slane %v1136, %v1163
        %v1165 = vlaneseq
        %v1166 = vshrl.u32 %v1165, 7
        %v1167 = vsub.s32 %v925, %v1166
        %v1168 = vrot.slane %v1139, %v1167
        %v1169 = vlaneseq
        %v1170 = vshrl.u32 %v1169, 7
        %v1171 = vsub.s32 %v925, %v1170
        %v1172 = vrot.slane %v1142, %v1171
        %v1173 = vlaneseq
        %v1174 = vshrl.u32 %v1173, 7
        %v1175 = vsub.s32 %v925, %v1174
        %v1176 = vrot.slane %v1145, %v1175
        %v1177 = vlaneseq
        %v1178 = vshrl.u32 %v1177, 7
        %v1179 = vsub.s32 %v925, %v1178
        %v1180 = vrot.slane %v1148, %v1179
        %v1181 = vsel %vm958, %v1156, %v1152
        %v1182 = vsel %vm960, %v1160, %v1181
        %v1183 = vsel %vm962, %v1164, %v1182
        %v1184 = vsel %vm964, %v1168, %v1183
        %v1185 = vsel %vm966, %v1172, %v1184
        %v1186 = vsel %vm968, %v1176, %v1185
        %v1187 = vsel %vm970, %v1180, %v1186
        %v1189 = vsel %vm973, %v1187, 0.0
        %1190 = vadd.xlane.f32.xlu0 %v1189
        %v1191 = vpop.xlane.xlu0 %1190
        %v1192 = vadd.f32 %v1191, 1e-15
        %v1193 = vrcp.pop %v1192
        %v1195 = vlaneseq
        %v1196 = vshrl.u32 %v1195, 7
        %v1197 = vsub.s32 0, %v1196
        %v1198 = vrot.slane %v1193, %v1197
        %v1199 = vlaneseq
        %v1200 = vshrl.u32 %v1199, 7
        %v1201 = vsub.s32 1, %v1200
        %v1202 = vrot.slane %v1193, %v1201
        %v1203 = vlaneseq
        %v1204 = vshrl.u32 %v1203, 7
        %v1205 = vsub.s32 2, %v1204
        %v1206 = vrot.slane %v1193, %v1205
        %v1207 = vlaneseq
        %v1208 = vshrl.u32 %v1207, 7
        %v1209 = vsub.s32 3, %v1208
        %v1210 = vrot.slane %v1193, %v1209
        %v1211 = vlaneseq
        %v1212 = vshrl.u32 %v1211, 7
        %v1213 = vsub.s32 4, %v1212
        %v1214 = vrot.slane %v1193, %v1213
        %v1215 = vlaneseq
        %v1216 = vshrl.u32 %v1215, 7
        %v1217 = vsub.s32 5, %v1216
        %v1218 = vrot.slane %v1193, %v1217
        %v1219 = vlaneseq
        %v1220 = vshrl.u32 %v1219, 7
        %v1221 = vsub.s32 6, %v1220
        %v1222 = vrot.slane %v1193, %v1221
        %v1223 = vlaneseq
        %v1224 = vshrl.u32 %v1223, 7
        %v1225 = vsub.s32 7, %v1224
        %v1226 = vrot.slane %v1193, %v1225
        %v1235 = vmul.f32 %v1109, %v1198
        %v1236 = vmul.f32 %v1110, %v1202
        %v1237 = vmul.f32 %v1111, %v1206
        %v1238 = vmul.f32 %v1112, %v1210
        %v1239 = vmul.f32 %v1113, %v1214
        %v1240 = vmul.f32 %v1114, %v1218
        %v1241 = vmul.f32 %v1115, %v1222
        %v1242 = vmul.f32 %v1116, %v1226
        %1244 = vset.pattern.permute.xlu0 0
        %1245 = vperm.xlu0 %1244, %v1020
        %v1246 = vpop.permute.xlu0 %1245
        %1249 = vset.pattern.permute.xlu0 0
        %1250 = vperm.xlu0 %1249, %v1021
        %v1251 = vpop.permute.xlu0 %1250
        %1254 = vset.pattern.permute.xlu0 0
        %1255 = vperm.xlu0 %1254, %v1022
        %v1256 = vpop.permute.xlu0 %1255
        %1259 = vset.pattern.permute.xlu0 0
        %1260 = vperm.xlu0 %1259, %v1023
        %v1261 = vpop.permute.xlu0 %1260
        %1264 = vset.pattern.permute.xlu0 0
        %1265 = vperm.xlu0 %1264, %v1024
        %v1266 = vpop.permute.xlu0 %1265
        %1269 = vset.pattern.permute.xlu0 0
        %1270 = vperm.xlu0 %1269, %v1025
        %v1271 = vpop.permute.xlu0 %1270
        %1274 = vset.pattern.permute.xlu0 0
        %1275 = vperm.xlu0 %1274, %v1026
        %v1276 = vpop.permute.xlu0 %1275
        %1279 = vset.pattern.permute.xlu0 0
        %1280 = vperm.xlu0 %1279, %v1027
        %v1281 = vpop.permute.xlu0 %1280
        %v1283 = vmul.f32 %v521, %v1246
        %v1284 = vmul.f32 %v522, %v1251
        %v1285 = vmul.f32 %v523, %v1256
        %v1286 = vmul.f32 %v524, %v1261
        %v1287 = vmul.f32 %v525, %v1266
        %v1288 = vmul.f32 %v526, %v1271
        %v1289 = vmul.f32 %v527, %v1276
        %v1290 = vmul.f32 %v528, %v1281
        %v1291 = vsel %vm423, %v1283, 0.0
        %v1292 = vrot.slane %v1291, 4
        %v1293 = vadd.f32 %v1291, %v1292
        %v1294 = vrot.slane %v1293, 2
        %v1295 = vadd.f32 %v1293, %v1294
        %v1296 = vrot.slane %v1295, 1
        %v1297 = vadd.f32 %v1295, %v1296
        %v1298 = vsel %vm423, %v1284, 0.0
        %v1299 = vrot.slane %v1298, 4
        %v1300 = vadd.f32 %v1298, %v1299
        %v1301 = vrot.slane %v1300, 2
        %v1302 = vadd.f32 %v1300, %v1301
        %v1303 = vrot.slane %v1302, 1
        %v1304 = vadd.f32 %v1302, %v1303
        %v1305 = vsel %vm423, %v1285, 0.0
        %v1306 = vrot.slane %v1305, 4
        %v1307 = vadd.f32 %v1305, %v1306
        %v1308 = vrot.slane %v1307, 2
        %v1309 = vadd.f32 %v1307, %v1308
        %v1310 = vrot.slane %v1309, 1
        %v1311 = vadd.f32 %v1309, %v1310
        %v1312 = vsel %vm423, %v1286, 0.0
        %v1313 = vrot.slane %v1312, 4
        %v1314 = vadd.f32 %v1312, %v1313
        %v1315 = vrot.slane %v1314, 2
        %v1316 = vadd.f32 %v1314, %v1315
        %v1317 = vrot.slane %v1316, 1
        %v1318 = vadd.f32 %v1316, %v1317
        %v1319 = vsel %vm423, %v1287, 0.0
        %v1320 = vrot.slane %v1319, 4
        %v1321 = vadd.f32 %v1319, %v1320
        %v1322 = vrot.slane %v1321, 2
        %v1323 = vadd.f32 %v1321, %v1322
        %v1324 = vrot.slane %v1323, 1
        %v1325 = vadd.f32 %v1323, %v1324
        %v1326 = vsel %vm423, %v1288, 0.0
        %v1327 = vrot.slane %v1326, 4
        %v1328 = vadd.f32 %v1326, %v1327
        %v1329 = vrot.slane %v1328, 2
        %v1330 = vadd.f32 %v1328, %v1329
        %v1331 = vrot.slane %v1330, 1
        %v1332 = vadd.f32 %v1330, %v1331
        %v1333 = vsel %vm423, %v1289, 0.0
        %v1334 = vrot.slane %v1333, 4
        %v1335 = vadd.f32 %v1333, %v1334
        %v1336 = vrot.slane %v1335, 2
        %v1337 = vadd.f32 %v1335, %v1336
        %v1338 = vrot.slane %v1337, 1
        %v1339 = vadd.f32 %v1337, %v1338
        %v1340 = vsel %vm423, %v1290, 0.0
        %v1341 = vrot.slane %v1340, 4
        %v1342 = vadd.f32 %v1340, %v1341
        %v1343 = vrot.slane %v1342, 2
        %v1344 = vadd.f32 %v1342, %v1343
        %v1345 = vrot.slane %v1344, 1
        %v1346 = vadd.f32 %v1344, %v1345
        %1348 = vset.pattern.permute.xlu0 0
        %1349 = vperm.xlu0 %1348, %v1235
        %v1350 = vpop.permute.xlu0 %1349
        %1353 = vset.pattern.permute.xlu0 0
        %1354 = vperm.xlu0 %1353, %v1236
        %v1355 = vpop.permute.xlu0 %1354
        %1358 = vset.pattern.permute.xlu0 0
        %1359 = vperm.xlu0 %1358, %v1237
        %v1360 = vpop.permute.xlu0 %1359
        %1363 = vset.pattern.permute.xlu0 0
        %1364 = vperm.xlu0 %1363, %v1238
        %v1365 = vpop.permute.xlu0 %1364
        %1368 = vset.pattern.permute.xlu0 0
        %1369 = vperm.xlu0 %1368, %v1239
        %v1370 = vpop.permute.xlu0 %1369
        %1373 = vset.pattern.permute.xlu0 0
        %1374 = vperm.xlu0 %1373, %v1240
        %v1375 = vpop.permute.xlu0 %1374
        %1378 = vset.pattern.permute.xlu0 0
        %1379 = vperm.xlu0 %1378, %v1241
        %v1380 = vpop.permute.xlu0 %1379
        %1383 = vset.pattern.permute.xlu0 0
        %1384 = vperm.xlu0 %1383, %v1242
        %v1385 = vpop.permute.xlu0 %1384
        %v1387 = vmul.f32 %v625, %v1350
        %v1388 = vmul.f32 %v626, %v1355
        %v1389 = vmul.f32 %v627, %v1360
        %v1390 = vmul.f32 %v628, %v1365
        %v1391 = vmul.f32 %v629, %v1370
        %v1392 = vmul.f32 %v630, %v1375
        %v1393 = vmul.f32 %v631, %v1380
        %v1394 = vmul.f32 %v632, %v1385
        %v1395 = vsel %vm423, %v1387, 0.0
        %v1396 = vrot.slane %v1395, 4
        %v1397 = vadd.f32 %v1395, %v1396
        %v1398 = vrot.slane %v1397, 2
        %v1399 = vadd.f32 %v1397, %v1398
        %v1400 = vrot.slane %v1399, 1
        %v1401 = vadd.f32 %v1399, %v1400
        %v1402 = vsel %vm423, %v1388, 0.0
        %v1403 = vrot.slane %v1402, 4
        %v1404 = vadd.f32 %v1402, %v1403
        %v1405 = vrot.slane %v1404, 2
        %v1406 = vadd.f32 %v1404, %v1405
        %v1407 = vrot.slane %v1406, 1
        %v1408 = vadd.f32 %v1406, %v1407
        %v1409 = vsel %vm423, %v1389, 0.0
        %v1410 = vrot.slane %v1409, 4
        %v1411 = vadd.f32 %v1409, %v1410
        %v1412 = vrot.slane %v1411, 2
        %v1413 = vadd.f32 %v1411, %v1412
        %v1414 = vrot.slane %v1413, 1
        %v1415 = vadd.f32 %v1413, %v1414
        %v1416 = vsel %vm423, %v1390, 0.0
        %v1417 = vrot.slane %v1416, 4
        %v1418 = vadd.f32 %v1416, %v1417
        %v1419 = vrot.slane %v1418, 2
        %v1420 = vadd.f32 %v1418, %v1419
        %v1421 = vrot.slane %v1420, 1
        %v1422 = vadd.f32 %v1420, %v1421
        %v1423 = vsel %vm423, %v1391, 0.0
        %v1424 = vrot.slane %v1423, 4
        %v1425 = vadd.f32 %v1423, %v1424
        %v1426 = vrot.slane %v1425, 2
        %v1427 = vadd.f32 %v1425, %v1426
        %v1428 = vrot.slane %v1427, 1
        %v1429 = vadd.f32 %v1427, %v1428
        %v1430 = vsel %vm423, %v1392, 0.0
        %v1431 = vrot.slane %v1430, 4
        %v1432 = vadd.f32 %v1430, %v1431
        %v1433 = vrot.slane %v1432, 2
        %v1434 = vadd.f32 %v1432, %v1433
        %v1435 = vrot.slane %v1434, 1
        %v1436 = vadd.f32 %v1434, %v1435
        %v1437 = vsel %vm423, %v1393, 0.0
        %v1438 = vrot.slane %v1437, 4
        %v1439 = vadd.f32 %v1437, %v1438
        %v1440 = vrot.slane %v1439, 2
        %v1441 = vadd.f32 %v1439, %v1440
        %v1442 = vrot.slane %v1441, 1
        %v1443 = vadd.f32 %v1441, %v1442
        %v1444 = vsel %vm423, %v1394, 0.0
        %v1445 = vrot.slane %v1444, 4
        %v1446 = vadd.f32 %v1444, %v1445
        %v1447 = vrot.slane %v1446, 2
        %v1448 = vadd.f32 %v1446, %v1447
        %v1449 = vrot.slane %v1448, 1
        %v1450 = vadd.f32 %v1448, %v1449
        %v1459 = vsel %vm958, %v1304, %v1297
        %v1460 = vsel %vm960, %v1311, %v1459
        %v1461 = vsel %vm962, %v1318, %v1460
        %v1462 = vsel %vm964, %v1325, %v1461
        %v1463 = vsel %vm966, %v1332, %v1462
        %v1464 = vsel %vm968, %v1339, %v1463
        %v1465 = vsel %vm970, %v1346, %v1464
        %v1467 = vmul.f32 %v422, %v1465
        %v1476 = vsel %vm958, %v1408, %v1401
        %v1477 = vsel %vm960, %v1415, %v1476
        %v1478 = vsel %vm962, %v1422, %v1477
        %v1479 = vsel %vm964, %v1429, %v1478
        %v1480 = vsel %vm966, %v1436, %v1479
        %v1481 = vsel %vm968, %v1443, %v1480
        %v1482 = vsel %vm970, %v1450, %v1481
        %v1484 = vmul.f32 %v422, %v1482
        %1485 = vrot.lane.b32.xlu0 %v1465, 32
        %v1486 = vpop.permute.xlu0 %1485
        %1488 = vrot.lane.b32.xlu0 %v1482, 64
        %v1489 = vpop.permute.xlu0 %1488
        %1492 = vrot.lane.b32.xlu0 %v1467, 96
        %v1493 = vpop.permute.xlu0 %1492
        %v1495 = vsel %vm423, %v422, %v1486
        %vm1496 = vcmask 523264
        %v1497 = vsel %vm1496, %v1495, %v1489
        %vm1498 = vcmask 785408
        %v1499 = vsel %vm1498, %v1497, %v1493
        %v1500 = vld [vmem:[#allocation7] sm:$0xff]
        %v1501 = vld [vmem:[#allocation7 + $0x8] sm:$0xff]
        %v1502 = vld [vmem:[#allocation7 + $0x10] sm:$0xff]
        %v1503 = vld [vmem:[#allocation7 + $0x18] sm:$0xff]
        %v1504 = vld [vmem:[#allocation7 + $0x20] sm:$0xff]
        %v1505 = vld [vmem:[#allocation7 + $0x28] sm:$0xff]
        %v1506 = vld [vmem:[#allocation7 + $0x30] sm:$0xff]
        %v1507 = vld [vmem:[#allocation7 + $0x38] sm:$0xff]
        %v1508 = vld [vmem:[#allocation7 + $0x40] sm:$0xff]
        %v1509 = vld [vmem:[#allocation7 + $0x48] sm:$0xff]
        %v1510 = vld [vmem:[#allocation7 + $0x50] sm:$0xff]
        %v1511 = vld [vmem:[#allocation7 + $0x58] sm:$0xff]
        %v1512 = vld [vmem:[#allocation7 + $0x60] sm:$0xff]
        %v1513 = vld [vmem:[#allocation7 + $0x68] sm:$0xff]
        %v1514 = vld [vmem:[#allocation7 + $0x70] sm:$0xff]
        %v1515 = vld [vmem:[#allocation7 + $0x78] sm:$0xff]
        %v1516 = vld [vmem:[#allocation7 + $0x80] sm:$0xff]
        %v1517 = vld [vmem:[#allocation7 + $0x88] sm:$0xff]
        %v1518 = vld [vmem:[#allocation7 + $0x90] sm:$0xff]
        %v1519 = vld [vmem:[#allocation7 + $0x98] sm:$0xff]
        %v1520 = vld [vmem:[%s6] sm:$0x1]
        %v1522 = vlaneseq
        %v1523 = vshrl.u32 %v1522, 7
        %v1524 = vsub.s32 0, %v1523
        %v1525 = vrot.slane %v1520, %v1524
        %v1528 = vsel %vm423, %v1484, 0
        %1530 = vmatprep.subr.mxu0 0.0
        %1531 = vmatpush1.msra.mxu0 %v1500
        %1532 = vmatprep.subr.mxu0 0.0
        %1533 = vmatpush1.msra.mxu0 %v1501
        %1534 = vmatprep.subr.mxu0 0.0
        %1535 = vmatpush1.msra.mxu0 %v1502
        %1536 = vmatprep.subr.mxu0 0.0
        %1537 = vmatpush1.msra.mxu0 %v1503
        %1538 = vmatprep.subr.mxu0 0.0
        %1539 = vmatpush1.msra.mxu0 %v1504
        %1540 = vmatprep.subr.mxu0 0.0
        %1541 = vmatpush1.msra.mxu0 %v1505
        %1542 = vmatprep.subr.mxu0 0.0
        %1543 = vmatpush1.msra.mxu0 %v1506
        %1544 = vmatprep.subr.mxu0 0.0
        %1545 = vmatpush1.msra.mxu0 %v1507
        %1546 = vmatprep.subr.mxu0 0.0
        %1547 = vmatpush1.msra.mxu0 %v1508
        %1548 = vmatprep.subr.mxu0 0.0
        %1549 = vmatpush1.msra.mxu0 %v1509
        %1550 = vmatprep.subr.mxu0 0.0
        %1551 = vmatpush1.msra.mxu0 %v1510
        %1552 = vmatprep.subr.mxu0 0.0
        %1553 = vmatpush1.msra.mxu0 %v1511
        %1554 = vmatprep.subr.mxu0 0.0
        %1555 = vmatpush1.msra.mxu0 %v1512
        %1556 = vmatprep.subr.mxu0 0.0
        %1557 = vmatpush1.msra.mxu0 %v1513
        %1558 = vmatprep.subr.mxu0 0.0
        %1559 = vmatpush1.msra.mxu0 %v1514
        %1560 = vmatprep.subr.mxu0 0.0
        %1561 = vmatpush1.msra.mxu0 %v1515
        %1562 = vmatprep.subr.mxu0 0.0
        %1563 = vmatpush1.msra.mxu0 %v1516
        %1564 = vmatprep.subr.mxu0 0.0
        %1565 = vmatpush1.msra.mxu0 %v1517
        %1566 = vmatprep.subr.mxu0 0.0
        %1567 = vmatpush1.msra.mxu0 %v1518
        %1568 = vmatprep.subr.mxu0 0.0
        %1569 = vmatpush1.msra.mxu0 %v1519
        %1570 = vmatprep.subr.mxu0 0.0
        %1571 = vmatpush1.msra.mxu0 0.0
        %1572 = vmatprep.subr.mxu0 0.0
        %1573 = vmatpush1.msra.mxu0 0.0
        %1574 = vmatprep.subr.mxu0 0.0
        %1575 = vmatpush1.msra.mxu0 0.0
        %1576 = vmatprep.subr.mxu0 0.0
        %1577 = vmatpush1.msra.mxu0 0.0
        %1578 = vmatprep.subr.mxu0 0.0
        %1579 = vmatpush1.msra.mxu0 0.0
        %1580 = vmatprep.subr.mxu0 0.0
        %1581 = vmatpush1.msra.mxu0 0.0
        %1582 = vmatprep.subr.mxu0 0.0
        %1583 = vmatpush1.msra.mxu0 0.0
        %1584 = vmatprep.subr.mxu0 0.0
        %1585 = vmatpush1.msra.mxu0 0.0
        %1586 = vmatprep.subr.mxu0 0.0
        %1587 = vmatpush1.msra.mxu0 0.0
        %1588 = vmatprep.subr.mxu0 0.0
        %1589 = vmatpush1.msra.mxu0 0.0
        %1590 = vmatprep.subr.mxu0 0.0
        %1591 = vmatpush1.msra.mxu0 0.0
        %1592 = vmatprep.subr.mxu0 0.0
        %1593 = vmatpush1.msra.mxu0 0.0
        %1594 = vmatprep.mubr.f32.mxu0 %v1528
        %1595 = vmatmul.mubr.f32.gmra.mrb[0].mxu0 %v1499
        %v1596 = vpop.f32.mrb[0].mxu0
        %v1597 = vadd.f32 %v1525, %v1596
        %v1598 = vpop.f32.mrb[0].mxu0
        %1599 = vdwg.mxu0
        %1600 = vst [vmem:[%s389] sm:$0xff] %v1597
        %s1601 = sand.u32 %s207, 1
        %s1602 = scalar_lea.sflag [#allocation4], %s1601
        %s1603 = sand.u32 %s207, 1
        %s1604 = smul.addr %s1603, 8
        %s1605 = scalar_lea.vmem [#allocation8], %s1604
        // Predicated region
        $region61: #{tpu_custom_call.1} parent=47 // pred_check
          %p1606 = pneg %p217
        $region62: #{tpu_custom_call.1} parent=47 // pred_check_branch
          %1608 = sbr.rel (%p1606) target = $region64
        $region63: #{tpu_custom_call.1} parent=47 // pred_region
          %s1610 = ssub.s32 128, 128
          %1611 = vsyncadd %s1602, %s1610
          %s1612 = smul.addr %s27, 128
          %s1613 = scalar_lea.hbm %s7, %s1612
          %s1615 = sshll.u32 %s1605, 4
          %s1616 = int_to_ptr.vmem [resolvable:$true] %s1615
          %1618 = dma.vmem_to_hbm [thread:$0]  %s1616, 128, %s1613, %s1602
        $region64: #{tpu_custom_call.1} parent=47 // pred_fallthru
          _
      $region48: #{tpu_custom_call.1} parent=5 // pred_fallthru
        _
      %p1619 = scmp.le.s32.totalorder 2, %s22
      // Predicated region
      $region65: #{tpu_custom_call.1} parent=5 // pred_check
        %p1620 = pneg %p1619
      $region66: #{tpu_custom_call.1} parent=5 // pred_check_branch
        %1622 = sbr.rel (%p1620) target = $region68
      $region67: #{tpu_custom_call.1} parent=5 // pred_region
        %s1623 = ssub.s32 %s22, 2
        // Predicated region
        $region69: #{tpu_custom_call.1} parent=67 // pred_check
          %p1624 = pneg %p223
        $region70: #{tpu_custom_call.1} parent=67 // pred_check_branch
          %1626 = sbr.rel (%p1624) target = $region72
        $region71: #{tpu_custom_call.1} parent=67 // pred_region
          %s1627 = sand.u32 %s208, 1
          %s1628 = scalar_lea.sflag [#allocation4], %s1627
          %s1629 = sand.u32 %s208, 1
          %s1630 = smul.addr %s1629, 8
          %s1631 = scalar_lea.vmem [#allocation8], %s1630
          %1632 = dma.done %s1628, 128
        $region72: #{tpu_custom_call.1} parent=67 // pred_fallthru
          _
      $region68: #{tpu_custom_call.1} parent=5 // pred_fallthru
        _
    $region6: #{tpu_custom_call.1} parent=1 // loop_footer
      %s26 = sadd.s32 1, %s22
    $region7: #{tpu_custom_call.1} parent=1 // loop_footer_branch
      %21 = sbr.rel target = $region3
    $region8: #{tpu_custom_call.1} parent=1 // loop_exit
      _
    %1633 = vsyncpa [#allocation3], 1
    %s1634 = scalar_lea.sflag [#allocation3], 1
    %1635 = vsyncpa %s1634, 1
    %1636 = vsyncpa [#allocation6], 1
    %s1637 = scalar_lea.sflag [#allocation6], 1
    %1638 = vsyncpa %s1637, 1
    %1639 = vsyncpa [#allocation4], 1
    %s1640 = scalar_lea.sflag [#allocation4], 1
    %1641 = vsyncpa %s1640, 1

</llo_original>
